<compile_context>
chip_gen: v7x
topology: tpu7x:2x2x1
jax: 0.10.0
libtpu: 0.0.40
codegen_flags: <defaults>
</compile_context>

<pallas_src>
import math

import jax
import jax.numpy as jnp
from jax import lax
from jax.experimental import pallas as pl
from jax.experimental.pallas import tpu as pltpu


def _mha_kernel(xq_ref, xk_ref, xv_ref,
                wq_ref, wk_ref, wv_ref, wo_ref,
                bq_ref, bk_ref, bv_ref, bo_ref,
                o_ref,
                q_scr, acc_scr, m_scr, l_scr):
    """One (batch, query-tile, kv-tile) grid step."""
    num_heads, _, d_k = wq_ref.shape          # (H, D, d_k)
    _, tq, d_model = o_ref.shape              # (1, tq, D)
    scale = 1.0 / math.sqrt(d_k)

    kv_idx = pl.program_id(2)
    last_kv = pl.num_programs(2) - 1

    # ---- init (first kv tile for this (b, q-tile)): project Q, reset stats.
    @pl.when(kv_idx == 0)
    def _():
        xq = xq_ref[0].astype(jnp.bfloat16)                    # (tq, D)
        wq = wq_ref[...].astype(jnp.bfloat16)                  # (H, D, d_k)
        for h in range(num_heads):
            qh = jnp.dot(xq, wq[h], preferred_element_type=jnp.float32)
            # Fold 1/sqrt(d_k) into Q once (instead of scaling (S, S) scores).
            q_scr[h] = (qh + bq_ref[h]) * scale                # (tq, d_k) f32
        m_scr[...] = jnp.full(m_scr.shape, -jnp.inf, m_scr.dtype)
        l_scr[...] = jnp.zeros(l_scr.shape, l_scr.dtype)
        acc_scr[...] = jnp.zeros(acc_scr.shape, acc_scr.dtype)

    # ---- this kv tile: project K/V, online-softmax update per head.
    xk = xk_ref[0].astype(jnp.bfloat16)                        # (tk, D)
    xv = xv_ref[0].astype(jnp.bfloat16)
    wk = wk_ref[...].astype(jnp.bfloat16)
    wv = wv_ref[...].astype(jnp.bfloat16)
    for h in range(num_heads):
        kh = jnp.dot(xk, wk[h], preferred_element_type=jnp.float32) + bk_ref[h]
        vh = jnp.dot(xv, wv[h], preferred_element_type=jnp.float32) + bv_ref[h]

        # scores = (q_h / sqrt(d_k)) @ k_h^T : contract on d_k, no transpose op.
        s = lax.dot_general(
            q_scr[h].astype(jnp.bfloat16), kh.astype(jnp.bfloat16),
            (((1,), (1,)), ((), ())),
            preferred_element_type=jnp.float32)                # (tq, tk) f32

        m_prev = m_scr[h]                                      # (tq, 1)
        m_new = jnp.maximum(m_prev, jnp.max(s, axis=-1, keepdims=True))
        alpha = jnp.exp(m_prev - m_new)                        # (tq, 1)
        p = jnp.exp(s - m_new)                                 # un-normalized
        l_scr[h] = alpha * l_scr[h] + jnp.sum(p, axis=-1, keepdims=True)
        acc_scr[h] = alpha * acc_scr[h] + jnp.dot(
            p.astype(jnp.bfloat16), vh.astype(jnp.bfloat16),
            preferred_element_type=jnp.float32)                # (tq, d_k)
        m_scr[h] = m_new

    # ---- finalize (last kv tile): normalize, combine heads through W_o.
    @pl.when(kv_idx == last_kv)
    def _():
        wo = wo_ref[...].astype(jnp.bfloat16)                  # (H, d_k, D)
        out = jnp.zeros((tq, d_model), jnp.float32)
        for h in range(num_heads):
            # Normalize the small (tq, d_k) accumulator, not the (tq, tk) probs;
            # reciprocal goes to the EUP slot.
            inv_l = pl.reciprocal(l_scr[h], approx=True)       # (tq, 1)
            attn_h = (acc_scr[h] * inv_l).astype(jnp.bfloat16)
            out = out + jnp.dot(attn_h, wo[h],
                                preferred_element_type=jnp.float32)
        o_ref[0] = (out + bo_ref[...]).astype(o_ref.dtype)


def multi_head_attention(query, key, value, params, *, num_heads,
                         q_tile=None, kv_tile=None):
    """query: (B, Sq, D), key/value: (B, Skv, D) f32.
    params = (wq, bq, wk, bk, wv, bv, wo, bo), w*: (D, D) applied as x @ w."""
    wq, bq, wk, bk, wv, bv, wo, bo = params
    B, Sq, D = query.shape
    _, Skv, _ = key.shape
    assert value.shape == key.shape
    assert D % num_heads == 0
    d_k = D // num_heads

    tq = q_tile or min(128, Sq)
    tk = kv_tile or min(128, Skv)
    assert Sq % tq == 0 and Skv % tk == 0
    n_q, n_kv = Sq // tq, Skv // tk

    # Head-major weight layout (done once in the wrapper, O(D^2)):
    #   wX_h[h] == wX[:, h*d_k:(h+1)*d_k]   -> (H, D, d_k)
    #   wo_h[h] == wo[h*d_k:(h+1)*d_k, :]   -> (H, d_k, D)
    wq_h = wq.reshape(D, num_heads, d_k).transpose(1, 0, 2)
    wk_h = wk.reshape(D, num_heads, d_k).transpose(1, 0, 2)
    wv_h = wv.reshape(D, num_heads, d_k).transpose(1, 0, 2)
    wo_h = wo.reshape(num_heads, d_k, D)
    bq_h = bq.reshape(num_heads, 1, d_k)
    bk_h = bk.reshape(num_heads, 1, d_k)
    bv_h = bv.reshape(num_heads, 1, d_k)
    bo_r = bo.reshape(1, D)

    xq_spec = pl.BlockSpec((1, tq, D), lambda b, qi, ki: (b, qi, 0))
    xkv_spec = pl.BlockSpec((1, tk, D), lambda b, qi, ki: (b, ki, 0))
    w_in_spec = pl.BlockSpec((num_heads, D, d_k), lambda b, qi, ki: (0, 0, 0))
    w_out_spec = pl.BlockSpec((num_heads, d_k, D), lambda b, qi, ki: (0, 0, 0))
    b_in_spec = pl.BlockSpec((num_heads, 1, d_k), lambda b, qi, ki: (0, 0, 0))
    b_out_spec = pl.BlockSpec((1, D), lambda b, qi, ki: (0, 0))
    out_spec = pl.BlockSpec((1, tq, D), lambda b, qi, ki: (b, qi, 0))

    # VMEM budget: double-buffered streamed blocks + resident weights + scratch.
    f32 = 4
    block_bytes = (2 * tq * D + 2 * tk * D) * f32
    weight_bytes = (4 * D * D + 3 * num_heads * d_k + D) * f32
    scratch_bytes = (2 * num_heads * tq * d_k + 2 * num_heads * tq) * f32
    vmem_limit = min(64 * 1024 * 1024,
                     max(8 * 1024 * 1024,
                         2 * (block_bytes + weight_bytes)
                         + scratch_bytes + (1 << 20)))

    flops = 4 * B * (Sq + Skv) * D * D + 4 * B * Sq * Skv * D
    transcendentals = B * num_heads * Sq * (Skv + n_kv)
    bytes_accessed = f32 * (2 * B * Sq * D + 2 * B * Skv * D + 4 * D * D + 4 * D)

    grid_spec = pltpu.PrefetchScalarGridSpec(
        num_scalar_prefetch=0,
        grid=(B, n_q, n_kv),
        in_specs=[xq_spec, xkv_spec, xkv_spec,
                  w_in_spec, w_in_spec, w_in_spec, w_out_spec,
                  b_in_spec, b_in_spec, b_in_spec, b_out_spec],
        out_specs=out_spec,
        scratch_shapes=[
            pltpu.VMEM((num_heads, tq, d_k), jnp.float32),   # scaled Q
            pltpu.VMEM((num_heads, tq, d_k), jnp.float32),   # flash accumulator
            pltpu.VMEM((num_heads, tq, 1), jnp.float32),     # running max m
            pltpu.VMEM((num_heads, tq, 1), jnp.float32),     # running sum l
        ])

    return pl.pallas_call(
        _mha_kernel,
        out_shape=jax.ShapeDtypeStruct((B, Sq, D), query.dtype),
        grid_spec=grid_spec,
        compiler_params=pltpu.CompilerParams(
            dimension_semantics=("parallel", "parallel", "arbitrary"),
            vmem_limit_bytes=int(vmem_limit)),
        cost_estimate=pl.CostEstimate(
            flops=int(flops),
            transcendentals=int(transcendentals),
            bytes_accessed=int(bytes_accessed)),
    )(query, key, value,
      wq_h, wk_h, wv_h, wo_h,
      bq_h, bk_h, bv_h, bo_r)


# --------------------------------------------------------------------------
# Pure-JAX reference (mirrors the PyTorch module, float32 HIGHEST precision).
# --------------------------------------------------------------------------
def mha_reference(query, key, value, params, *, num_heads):
    wq, bq, wk, bk, wv, bv, wo, bo = params
    B, Sq, D = query.shape
    d_k = D // num_heads
    hp = jax.lax.Precision.HIGHEST

    def proj(x, w, b):
        return jnp.matmul(x, w, precision=hp) + b

    def split(x):
        b, s, _ = x.shape
        return x.reshape(b, s, num_heads, d_k).transpose(0, 2, 1, 3)

    Q = split(proj(query, wq, bq))
    K = split(proj(key, wk, bk))
    V = split(proj(value, wv, bv))

    scores = jnp.einsum('bhqd,bhkd->bhqk', Q, K, precision=hp) / math.sqrt(d_k)
    probs = jax.nn.softmax(scores, axis=-1)
    attn = jnp.einsum('bhqk,bhkd->bhqd', probs, V, precision=hp)
    attn = attn.transpose(0, 2, 1, 3).reshape(B, Sq, D)
    return jnp.matmul(attn, wo, precision=hp) + bo


if __name__ == "__main__":
    def run_case(B, S, D, H, *, q_tile=None, kv_tile=None):
        root = jax.random.PRNGKey(0)
        keys = jax.random.split(root, 11)
        query = jax.random.normal(keys[0], (B, S, D), dtype=jnp.float32)
        key_in = jax.random.normal(keys[1], (B, S, D), dtype=jnp.float32)
        value = jax.random.normal(keys[2], (B, S, D), dtype=jnp.float32)

        bound = 1.0 / math.sqrt(D)   # nn.Linear-style init range

        def u(k, shape):
            return jax.random.uniform(k, shape, jnp.float32, -bound, bound)

        wq, wk, wv, wo = (u(keys[3], (D, D)), u(keys[4], (D, D)),
                          u(keys[5], (D, D)), u(keys[6], (D, D)))
        bq, bk, bv, bo = (u(keys[7], (D,)), u(keys[8], (D,)),
                          u(keys[9], (D,)), u(keys[10], (D,)))
        params = (wq, bq, wk, bk, wv, bv, wo, bo)

        out = jax.block_until_ready(
            multi_head_attention(query, key_in, value, params,
                                 num_heads=H, q_tile=q_tile, kv_tile=kv_tile))
        ref = jax.block_until_ready(
            mha_reference(query, key_in, value, params, num_heads=H))

        assert out.shape == (B, S, D)
        err = float(jnp.max(jnp.abs(out - ref)))
        # bf16 MXU feeds (f32 accumulate) vs an f32 HIGHEST-precision reference:
        # expected mismatch is ~1e-2 scale at these magnitudes.
        assert jnp.allclose(out, ref, atol=3e-2, rtol=3e-2), (
            f"mismatch vs reference: max abs err = {err}")
        return err

    run_case(2, 8, 32, 4)                            # single-tile path
    run_case(2, 16, 32, 4, q_tile=8, kv_tile=8)      # multi-tile flash path

    print("KERNEL_OK")
</pallas_src>

<mosaic_0001>
module attributes {stable_mosaic.version = 11 : i64} {
  func.func @_mha_kernel(%arg0: i32, %arg1: i32, %arg2: i32, %arg3: memref<1x8x32xf32, #tpu.memory_space<vmem>>, %arg4: memref<1x8x32xf32, #tpu.memory_space<vmem>>, %arg5: memref<1x8x32xf32, #tpu.memory_space<vmem>>, %arg6: memref<4x32x8xf32, #tpu.memory_space<vmem>>, %arg7: memref<4x32x8xf32, #tpu.memory_space<vmem>>, %arg8: memref<4x32x8xf32, #tpu.memory_space<vmem>>, %arg9: memref<4x8x32xf32, #tpu.memory_space<vmem>>, %arg10: memref<4x1x8xf32, #tpu.memory_space<vmem>>, %arg11: memref<4x1x8xf32, #tpu.memory_space<vmem>>, %arg12: memref<4x1x8xf32, #tpu.memory_space<vmem>>, %arg13: memref<1x32xf32, #tpu.memory_space<vmem>>, %arg14: memref<1x8x32xf32, #tpu.memory_space<vmem>>, %arg15: memref<4x8x8xf32, #tpu.memory_space<vmem>>, %arg16: memref<4x8x8xf32, #tpu.memory_space<vmem>>, %arg17: memref<4x8x1xf32, #tpu.memory_space<vmem>>, %arg18: memref<4x8x1xf32, #tpu.memory_space<vmem>>) attributes {dimension_semantics = [#tpu.dimension_semantics<parallel>, #tpu.dimension_semantics<parallel>, #tpu.dimension_semantics<arbitrary>], iteration_bounds = array<i64: 2, 1, 1>, scalar_prefetch = 0 : i64, scratch_operands = 4 : i64, tpu.core_type = #tpu.core_type<tc>, window_params = [{transform_indices = @transform_0, window_bounds = array<i64: 1, 8, 32>}, {transform_indices = @transform_1, window_bounds = array<i64: 1, 8, 32>}, {transform_indices = @transform_2, window_bounds = array<i64: 1, 8, 32>}, {pipeline_mode = #tpu.pipeline_mode<synchronous>, transform_indices = @transform_3, window_bounds = array<i64: 4, 32, 8>}, {pipeline_mode = #tpu.pipeline_mode<synchronous>, transform_indices = @transform_4, window_bounds = array<i64: 4, 32, 8>}, {pipeline_mode = #tpu.pipeline_mode<synchronous>, transform_indices = @transform_5, window_bounds = array<i64: 4, 32, 8>}, {pipeline_mode = #tpu.pipeline_mode<synchronous>, transform_indices = @transform_6, window_bounds = array<i64: 4, 8, 32>}, {pipeline_mode = #tpu.pipeline_mode<synchronous>, transform_indices = @transform_7, window_bounds = array<i64: 4, 1, 8>}, {pipeline_mode = #tpu.pipeline_mode<synchronous>, transform_indices = @transform_8, window_bounds = array<i64: 4, 1, 8>}, {pipeline_mode = #tpu.pipeline_mode<synchronous>, transform_indices = @transform_9, window_bounds = array<i64: 4, 1, 8>}, {pipeline_mode = #tpu.pipeline_mode<synchronous>, transform_indices = @transform_10, window_bounds = array<i64: 1, 32>}, {transform_indices = @transform_11, window_bounds = array<i64: 1, 8, 32>}]} {
    %c0_i32 = arith.constant 0 : i32
    %0 = arith.cmpi eq, %arg2, %c0_i32 : i32
    %1 = arith.extui %0 : i1 to i32
    %c0_i32_0 = arith.constant 0 : i32
    %2 = arith.cmpi ne, %1, %c0_i32_0 : i32
    scf.if %2 {
      %c0_142 = arith.constant 0 : index
      %c0_143 = arith.constant 0 : index
      %c0_144 = arith.constant 0 : index
      %224 = vector.load %arg3[%c0_142, %c0_143, %c0_144] : memref<1x8x32xf32, #tpu.memory_space<vmem>>, vector<1x8x32xf32>
      %225 = vector.shape_cast %224 : vector<1x8x32xf32> to vector<8x32xf32>
      %226 = arith.truncf %225 : vector<8x32xf32> to vector<8x32xbf16>
      %c0_145 = arith.constant 0 : index
      %c0_146 = arith.constant 0 : index
      %c0_147 = arith.constant 0 : index
      %227 = vector.load %arg6[%c0_145, %c0_146, %c0_147] : memref<4x32x8xf32, #tpu.memory_space<vmem>>, vector<4x32x8xf32>
      %228 = arith.truncf %227 : vector<4x32x8xf32> to vector<4x32x8xbf16>
      %229 = vector.extract_strided_slice %228 {offsets = [0, 0, 0], sizes = [1, 32, 8], strides = [1, 1, 1]} : vector<4x32x8xbf16> to vector<1x32x8xbf16>
      %230 = vector.shape_cast %229 : vector<1x32x8xbf16> to vector<32x8xbf16>
      %cst_148 = arith.constant dense<0.000000e+00> : vector<8x8xf32>
      %231 = tpu.matmul %226, %230, %cst_148 {dimension_numbers = #tpu.dot_dimension_numbers<[1], [0], [0], [1], [0, 0, 1, 1], [], []>} : vector<8x32xbf16>, vector<32x8xbf16>, vector<8x8xf32> -> vector<8x8xf32>
      %c0_149 = arith.constant 0 : index
      %c0_150 = arith.constant 0 : index
      %c0_151 = arith.constant 0 : index
      %232 = vector.load %arg10[%c0_149, %c0_150, %c0_151] : memref<4x1x8xf32, #tpu.memory_space<vmem>>, vector<1x1x8xf32>
      %233 = vector.shape_cast %232 : vector<1x1x8xf32> to vector<1x8xf32>
      %234 = vector.broadcast %233 : vector<1x8xf32> to vector<8x8xf32>
      %235 = arith.addf %231, %234 : vector<8x8xf32>
      %cst_152 = arith.constant 0.353553385 : f32
      %236 = vector.broadcast %cst_152 : f32 to vector<8x8xf32>
      %237 = arith.mulf %235, %236 : vector<8x8xf32>
      %c0_153 = arith.constant 0 : index
      %c0_154 = arith.constant 0 : index
      %c0_155 = arith.constant 0 : index
      %238 = vector.load %arg15[%c0_153, %c0_154, %c0_155] : memref<4x8x8xf32, #tpu.memory_space<vmem>>, vector<1x8x8xf32>
      %239 = vector.shape_cast %238 : vector<1x8x8xf32> to vector<8x8xf32>
      %240 = vector.shape_cast %237 : vector<8x8xf32> to vector<1x8x8xf32>
      tpu.vector_store %arg15[%c0_153, %c0_154, %c0_155], %240 {strides = array<i32>} : memref<4x8x8xf32, #tpu.memory_space<vmem>>, vector<1x8x8xf32>,
      %241 = vector.extract_strided_slice %228 {offsets = [1, 0, 0], sizes = [1, 32, 8], strides = [1, 1, 1]} : vector<4x32x8xbf16> to vector<1x32x8xbf16>
      %242 = vector.shape_cast %241 : vector<1x32x8xbf16> to vector<32x8xbf16>
      %cst_156 = arith.constant dense<0.000000e+00> : vector<8x8xf32>
      %243 = tpu.matmul %226, %242, %cst_156 {dimension_numbers = #tpu.dot_dimension_numbers<[1], [0], [0], [1], [0, 0, 1, 1], [], []>} : vector<8x32xbf16>, vector<32x8xbf16>, vector<8x8xf32> -> vector<8x8xf32>
      %c1_157 = arith.constant 1 : index
      %c0_158 = arith.constant 0 : index
      %c0_159 = arith.constant 0 : index
      %244 = vector.load %arg10[%c1_157, %c0_158, %c0_159] : memref<4x1x8xf32, #tpu.memory_space<vmem>>, vector<1x1x8xf32>
      %245 = vector.shape_cast %244 : vector<1x1x8xf32> to vector<1x8xf32>
      %246 = vector.broadcast %245 : vector<1x8xf32> to vector<8x8xf32>
      %247 = arith.addf %243, %246 : vector<8x8xf32>
      %cst_160 = arith.constant 0.353553385 : f32
      %248 = vector.broadcast %cst_160 : f32 to vector<8x8xf32>
      %249 = arith.mulf %247, %248 : vector<8x8xf32>
      %c1_161 = arith.constant 1 : index
      %c0_162 = arith.constant 0 : index
      %c0_163 = arith.constant 0 : index
      %250 = vector.load %arg15[%c1_161, %c0_162, %c0_163] : memref<4x8x8xf32, #tpu.memory_space<vmem>>, vector<1x8x8xf32>
      %251 = vector.shape_cast %250 : vector<1x8x8xf32> to vector<8x8xf32>
      %252 = vector.shape_cast %249 : vector<8x8xf32> to vector<1x8x8xf32>
      tpu.vector_store %arg15[%c1_161, %c0_162, %c0_163], %252 {strides = array<i32>} : memref<4x8x8xf32, #tpu.memory_space<vmem>>, vector<1x8x8xf32>,
      %253 = vector.extract_strided_slice %228 {offsets = [2, 0, 0], sizes = [1, 32, 8], strides = [1, 1, 1]} : vector<4x32x8xbf16> to vector<1x32x8xbf16>
      %254 = vector.shape_cast %253 : vector<1x32x8xbf16> to vector<32x8xbf16>
      %cst_164 = arith.constant dense<0.000000e+00> : vector<8x8xf32>
      %255 = tpu.matmul %226, %254, %cst_164 {dimension_numbers = #tpu.dot_dimension_numbers<[1], [0], [0], [1], [0, 0, 1, 1], [], []>} : vector<8x32xbf16>, vector<32x8xbf16>, vector<8x8xf32> -> vector<8x8xf32>
      %c2_165 = arith.constant 2 : index
      %c0_166 = arith.constant 0 : index
      %c0_167 = arith.constant 0 : index
      %256 = vector.load %arg10[%c2_165, %c0_166, %c0_167] : memref<4x1x8xf32, #tpu.memory_space<vmem>>, vector<1x1x8xf32>
      %257 = vector.shape_cast %256 : vector<1x1x8xf32> to vector<1x8xf32>
      %258 = vector.broadcast %257 : vector<1x8xf32> to vector<8x8xf32>
      %259 = arith.addf %255, %258 : vector<8x8xf32>
      %cst_168 = arith.constant 0.353553385 : f32
      %260 = vector.broadcast %cst_168 : f32 to vector<8x8xf32>
      %261 = arith.mulf %259, %260 : vector<8x8xf32>
      %c2_169 = arith.constant 2 : index
      %c0_170 = arith.constant 0 : index
      %c0_171 = arith.constant 0 : index
      %262 = vector.load %arg15[%c2_169, %c0_170, %c0_171] : memref<4x8x8xf32, #tpu.memory_space<vmem>>, vector<1x8x8xf32>
      %263 = vector.shape_cast %262 : vector<1x8x8xf32> to vector<8x8xf32>
      %264 = vector.shape_cast %261 : vector<8x8xf32> to vector<1x8x8xf32>
      tpu.vector_store %arg15[%c2_169, %c0_170, %c0_171], %264 {strides = array<i32>} : memref<4x8x8xf32, #tpu.memory_space<vmem>>, vector<1x8x8xf32>,
      %265 = vector.extract_strided_slice %228 {offsets = [3, 0, 0], sizes = [1, 32, 8], strides = [1, 1, 1]} : vector<4x32x8xbf16> to vector<1x32x8xbf16>
      %266 = vector.shape_cast %265 : vector<1x32x8xbf16> to vector<32x8xbf16>
      %cst_172 = arith.constant dense<0.000000e+00> : vector<8x8xf32>
      %267 = tpu.matmul %226, %266, %cst_172 {dimension_numbers = #tpu.dot_dimension_numbers<[1], [0], [0], [1], [0, 0, 1, 1], [], []>} : vector<8x32xbf16>, vector<32x8xbf16>, vector<8x8xf32> -> vector<8x8xf32>
      %c3_173 = arith.constant 3 : index
      %c0_174 = arith.constant 0 : index
      %c0_175 = arith.constant 0 : index
      %268 = vector.load %arg10[%c3_173, %c0_174, %c0_175] : memref<4x1x8xf32, #tpu.memory_space<vmem>>, vector<1x1x8xf32>
      %269 = vector.shape_cast %268 : vector<1x1x8xf32> to vector<1x8xf32>
      %270 = vector.broadcast %269 : vector<1x8xf32> to vector<8x8xf32>
      %271 = arith.addf %267, %270 : vector<8x8xf32>
      %cst_176 = arith.constant 0.353553385 : f32
      %272 = vector.broadcast %cst_176 : f32 to vector<8x8xf32>
      %273 = arith.mulf %271, %272 : vector<8x8xf32>
      %c3_177 = arith.constant 3 : index
      %c0_178 = arith.constant 0 : index
      %c0_179 = arith.constant 0 : index
      %274 = vector.load %arg15[%c3_177, %c0_178, %c0_179] : memref<4x8x8xf32, #tpu.memory_space<vmem>>, vector<1x8x8xf32>
      %275 = vector.shape_cast %274 : vector<1x8x8xf32> to vector<8x8xf32>
      %276 = vector.shape_cast %273 : vector<8x8xf32> to vector<1x8x8xf32>
      tpu.vector_store %arg15[%c3_177, %c0_178, %c0_179], %276 {strides = array<i32>} : memref<4x8x8xf32, #tpu.memory_space<vmem>>, vector<1x8x8xf32>,
      %cst_180 = arith.constant 0xFF800000 : f32
      %277 = vector.broadcast %cst_180 : f32 to vector<4x8x1xf32>
      %c0_181 = arith.constant 0 : index
      %c0_182 = arith.constant 0 : index
      %c0_183 = arith.constant 0 : index
      %278 = vector.load %arg17[%c0_181, %c0_182, %c0_183] : memref<4x8x1xf32, #tpu.memory_space<vmem>>, vector<4x8x1xf32>
      tpu.vector_store %arg17[%c0_181, %c0_182, %c0_183], %277 {strides = array<i32>} : memref<4x8x1xf32, #tpu.memory_space<vmem>>, vector<4x8x1xf32>,
      %cst_184 = arith.constant 0.000000e+00 : f32
      %279 = vector.broadcast %cst_184 : f32 to vector<4x8x1xf32>
      %c0_185 = arith.constant 0 : index
      %c0_186 = arith.constant 0 : index
      %c0_187 = arith.constant 0 : index
      %280 = vector.load %arg18[%c0_185, %c0_186, %c0_187] : memref<4x8x1xf32, #tpu.memory_space<vmem>>, vector<4x8x1xf32>
      tpu.vector_store %arg18[%c0_185, %c0_186, %c0_187], %279 {strides = array<i32>} : memref<4x8x1xf32, #tpu.memory_space<vmem>>, vector<4x8x1xf32>,
      %cst_188 = arith.constant 0.000000e+00 : f32
      %281 = vector.broadcast %cst_188 : f32 to vector<4x8x8xf32>
      %c0_189 = arith.constant 0 : index
      %c0_190 = arith.constant 0 : index
      %c0_191 = arith.constant 0 : index
      %282 = vector.load %arg16[%c0_189, %c0_190, %c0_191] : memref<4x8x8xf32, #tpu.memory_space<vmem>>, vector<4x8x8xf32>
      tpu.vector_store %arg16[%c0_189, %c0_190, %c0_191], %281 {strides = array<i32>} : memref<4x8x8xf32, #tpu.memory_space<vmem>>, vector<4x8x8xf32>,
    } else {
    }
    %c0 = arith.constant 0 : index
    %c0_1 = arith.constant 0 : index
    %c0_2 = arith.constant 0 : index
    %3 = vector.load %arg4[%c0, %c0_1, %c0_2] : memref<1x8x32xf32, #tpu.memory_space<vmem>>, vector<1x8x32xf32>
    %4 = vector.shape_cast %3 : vector<1x8x32xf32> to vector<8x32xf32>
    %5 = arith.truncf %4 : vector<8x32xf32> to vector<8x32xbf16>
    %c0_3 = arith.constant 0 : index
    %c0_4 = arith.constant 0 : index
    %c0_5 = arith.constant 0 : index
    %6 = vector.load %arg5[%c0_3, %c0_4, %c0_5] : memref<1x8x32xf32, #tpu.memory_space<vmem>>, vector<1x8x32xf32>
    %7 = vector.shape_cast %6 : vector<1x8x32xf32> to vector<8x32xf32>
    %8 = arith.truncf %7 : vector<8x32xf32> to vector<8x32xbf16>
    %c0_6 = arith.constant 0 : index
    %c0_7 = arith.constant 0 : index
    %c0_8 = arith.constant 0 : index
    %9 = vector.load %arg7[%c0_6, %c0_7, %c0_8] : memref<4x32x8xf32, #tpu.memory_space<vmem>>, vector<4x32x8xf32>
    %10 = arith.truncf %9 : vector<4x32x8xf32> to vector<4x32x8xbf16>
    %c0_9 = arith.constant 0 : index
    %c0_10 = arith.constant 0 : index
    %c0_11 = arith.constant 0 : index
    %11 = vector.load %arg8[%c0_9, %c0_10, %c0_11] : memref<4x32x8xf32, #tpu.memory_space<vmem>>, vector<4x32x8xf32>
    %12 = arith.truncf %11 : vector<4x32x8xf32> to vector<4x32x8xbf16>
    %13 = vector.extract_strided_slice %10 {offsets = [0, 0, 0], sizes = [1, 32, 8], strides = [1, 1, 1]} : vector<4x32x8xbf16> to vector<1x32x8xbf16>
    %14 = vector.shape_cast %13 : vector<1x32x8xbf16> to vector<32x8xbf16>
    %cst = arith.constant dense<0.000000e+00> : vector<8x8xf32>
    %15 = tpu.matmul %5, %14, %cst {dimension_numbers = #tpu.dot_dimension_numbers<[1], [0], [0], [1], [0, 0, 1, 1], [], []>} : vector<8x32xbf16>, vector<32x8xbf16>, vector<8x8xf32> -> vector<8x8xf32>
    %c0_12 = arith.constant 0 : index
    %c0_13 = arith.constant 0 : index
    %c0_14 = arith.constant 0 : index
    %16 = vector.load %arg11[%c0_12, %c0_13, %c0_14] : memref<4x1x8xf32, #tpu.memory_space<vmem>>, vector<1x1x8xf32>
    %17 = vector.shape_cast %16 : vector<1x1x8xf32> to vector<1x8xf32>
    %18 = vector.broadcast %17 : vector<1x8xf32> to vector<8x8xf32>
    %19 = arith.addf %15, %18 : vector<8x8xf32>
    %20 = vector.extract_strided_slice %12 {offsets = [0, 0, 0], sizes = [1, 32, 8], strides = [1, 1, 1]} : vector<4x32x8xbf16> to vector<1x32x8xbf16>
    %21 = vector.shape_cast %20 : vector<1x32x8xbf16> to vector<32x8xbf16>
    %cst_15 = arith.constant dense<0.000000e+00> : vector<8x8xf32>
    %22 = tpu.matmul %8, %21, %cst_15 {dimension_numbers = #tpu.dot_dimension_numbers<[1], [0], [0], [1], [0, 0, 1, 1], [], []>} : vector<8x32xbf16>, vector<32x8xbf16>, vector<8x8xf32> -> vector<8x8xf32>
    %c0_16 = arith.constant 0 : index
    %c0_17 = arith.constant 0 : index
    %c0_18 = arith.constant 0 : index
    %23 = vector.load %arg12[%c0_16, %c0_17, %c0_18] : memref<4x1x8xf32, #tpu.memory_space<vmem>>, vector<1x1x8xf32>
    %24 = vector.shape_cast %23 : vector<1x1x8xf32> to vector<1x8xf32>
    %25 = vector.broadcast %24 : vector<1x8xf32> to vector<8x8xf32>
    %26 = arith.addf %22, %25 : vector<8x8xf32>
    %c0_19 = arith.constant 0 : index
    %c0_20 = arith.constant 0 : index
    %c0_21 = arith.constant 0 : index
    %27 = vector.load %arg15[%c0_19, %c0_20, %c0_21] : memref<4x8x8xf32, #tpu.memory_space<vmem>>, vector<1x8x8xf32>
    %28 = vector.shape_cast %27 : vector<1x8x8xf32> to vector<8x8xf32>
    %29 = arith.truncf %28 : vector<8x8xf32> to vector<8x8xbf16>
    %30 = arith.truncf %19 : vector<8x8xf32> to vector<8x8xbf16>
    %cst_22 = arith.constant dense<0.000000e+00> : vector<8x8xf32>
    %31 = tpu.matmul %29, %30, %cst_22 {dimension_numbers = #tpu.dot_dimension_numbers<[1], [1], [0], [0], [0, 0, 1, 0], [], []>} : vector<8x8xbf16>, vector<8x8xbf16>, vector<8x8xf32> -> vector<8x8xf32>
    %c0_23 = arith.constant 0 : index
    %c0_24 = arith.constant 0 : index
    %c0_25 = arith.constant 0 : index
    %32 = vector.load %arg17[%c0_23, %c0_24, %c0_25] : memref<4x8x1xf32, #tpu.memory_space<vmem>>, vector<1x8x1xf32>
    %33 = vector.shape_cast %32 : vector<1x8x1xf32> to vector<8x1xf32>
    %cst_26 = arith.constant dense<0xFF800000> : vector<8xf32>
    %34 = vector.multi_reduction <maximumf>, %31, %cst_26 [1] : vector<8x8xf32> to vector<8xf32>
    %35 = vector.shape_cast %34 : vector<8xf32> to vector<8x1xf32>
    %36 = arith.maximumf %33, %35 : vector<8x1xf32>
    %37 = arith.subf %33, %36 : vector<8x1xf32>
    %38 = math.exp %37 : vector<8x1xf32>
    %39 = vector.broadcast %36 : vector<8x1xf32> to vector<8x8xf32>
    %40 = arith.subf %31, %39 : vector<8x8xf32>
    %41 = math.exp %40 : vector<8x8xf32>
    %c0_27 = arith.constant 0 : index
    %c0_28 = arith.constant 0 : index
    %c0_29 = arith.constant 0 : index
    %42 = vector.load %arg18[%c0_27, %c0_28, %c0_29] : memref<4x8x1xf32, #tpu.memory_space<vmem>>, vector<1x8x1xf32>
    %43 = vector.shape_cast %42 : vector<1x8x1xf32> to vector<8x1xf32>
    %44 = arith.mulf %38, %43 : vector<8x1xf32>
    %cst_30 = arith.constant dense<0.000000e+00> : vector<8xf32>
    %45 = vector.multi_reduction <add>, %41, %cst_30 [1] : vector<8x8xf32> to vector<8xf32>
    %46 = vector.shape_cast %45 : vector<8xf32> to vector<8x1xf32>
    %47 = arith.addf %44, %46 : vector<8x1xf32>
    %c0_31 = arith.constant 0 : index
    %c0_32 = arith.constant 0 : index
    %c0_33 = arith.constant 0 : index
    %48 = vector.load %arg18[%c0_31, %c0_32, %c0_33] : memref<4x8x1xf32, #tpu.memory_space<vmem>>, vector<1x8x1xf32>
    %49 = vector.shape_cast %48 : vector<1x8x1xf32> to vector<8x1xf32>
    %50 = vector.shape_cast %47 : vector<8x1xf32> to vector<1x8x1xf32>
    tpu.vector_store %arg18[%c0_31, %c0_32, %c0_33], %50 {strides = array<i32>} : memref<4x8x1xf32, #tpu.memory_space<vmem>>, vector<1x8x1xf32>,
    %c0_34 = arith.constant 0 : index
    %c0_35 = arith.constant 0 : index
    %c0_36 = arith.constant 0 : index
    %51 = vector.load %arg16[%c0_34, %c0_35, %c0_36] : memref<4x8x8xf32, #tpu.memory_space<vmem>>, vector<1x8x8xf32>
    %52 = vector.shape_cast %51 : vector<1x8x8xf32> to vector<8x8xf32>
    %53 = vector.broadcast %38 : vector<8x1xf32> to vector<8x8xf32>
    %54 = arith.mulf %53, %52 : vector<8x8xf32>
    %55 = arith.truncf %41 : vector<8x8xf32> to vector<8x8xbf16>
    %56 = arith.truncf %26 : vector<8x8xf32> to vector<8x8xbf16>
    %cst_37 = arith.constant dense<0.000000e+00> : vector<8x8xf32>
    %57 = tpu.matmul %55, %56, %cst_37 {dimension_numbers = #tpu.dot_dimension_numbers<[1], [0], [0], [1], [0, 0, 1, 1], [], []>} : vector<8x8xbf16>, vector<8x8xbf16>, vector<8x8xf32> -> vector<8x8xf32>
    %58 = arith.addf %54, %57 : vector<8x8xf32>
    %c0_38 = arith.constant 0 : index
    %c0_39 = arith.constant 0 : index
    %c0_40 = arith.constant 0 : index
    %59 = vector.load %arg16[%c0_38, %c0_39, %c0_40] : memref<4x8x8xf32, #tpu.memory_space<vmem>>, vector<1x8x8xf32>
    %60 = vector.shape_cast %59 : vector<1x8x8xf32> to vector<8x8xf32>
    %61 = vector.shape_cast %58 : vector<8x8xf32> to vector<1x8x8xf32>
    tpu.vector_store %arg16[%c0_38, %c0_39, %c0_40], %61 {strides = array<i32>} : memref<4x8x8xf32, #tpu.memory_space<vmem>>, vector<1x8x8xf32>,
    %c0_41 = arith.constant 0 : index
    %c0_42 = arith.constant 0 : index
    %c0_43 = arith.constant 0 : index
    %62 = vector.load %arg17[%c0_41, %c0_42, %c0_43] : memref<4x8x1xf32, #tpu.memory_space<vmem>>, vector<1x8x1xf32>
    %63 = vector.shape_cast %62 : vector<1x8x1xf32> to vector<8x1xf32>
    %64 = vector.shape_cast %36 : vector<8x1xf32> to vector<1x8x1xf32>
    tpu.vector_store %arg17[%c0_41, %c0_42, %c0_43], %64 {strides = array<i32>} : memref<4x8x1xf32, #tpu.memory_space<vmem>>, vector<1x8x1xf32>,
    %65 = vector.extract_strided_slice %10 {offsets = [1, 0, 0], sizes = [1, 32, 8], strides = [1, 1, 1]} : vector<4x32x8xbf16> to vector<1x32x8xbf16>
    %66 = vector.shape_cast %65 : vector<1x32x8xbf16> to vector<32x8xbf16>
    %cst_44 = arith.constant dense<0.000000e+00> : vector<8x8xf32>
    %67 = tpu.matmul %5, %66, %cst_44 {dimension_numbers = #tpu.dot_dimension_numbers<[1], [0], [0], [1], [0, 0, 1, 1], [], []>} : vector<8x32xbf16>, vector<32x8xbf16>, vector<8x8xf32> -> vector<8x8xf32>
    %c1 = arith.constant 1 : index
    %c0_45 = arith.constant 0 : index
    %c0_46 = arith.constant 0 : index
    %68 = vector.load %arg11[%c1, %c0_45, %c0_46] : memref<4x1x8xf32, #tpu.memory_space<vmem>>, vector<1x1x8xf32>
    %69 = vector.shape_cast %68 : vector<1x1x8xf32> to vector<1x8xf32>
    %70 = vector.broadcast %69 : vector<1x8xf32> to vector<8x8xf32>
    %71 = arith.addf %67, %70 : vector<8x8xf32>
    %72 = vector.extract_strided_slice %12 {offsets = [1, 0, 0], sizes = [1, 32, 8], strides = [1, 1, 1]} : vector<4x32x8xbf16> to vector<1x32x8xbf16>
    %73 = vector.shape_cast %72 : vector<1x32x8xbf16> to vector<32x8xbf16>
    %cst_47 = arith.constant dense<0.000000e+00> : vector<8x8xf32>
    %74 = tpu.matmul %8, %73, %cst_47 {dimension_numbers = #tpu.dot_dimension_numbers<[1], [0], [0], [1], [0, 0, 1, 1], [], []>} : vector<8x32xbf16>, vector<32x8xbf16>, vector<8x8xf32> -> vector<8x8xf32>
    %c1_48 = arith.constant 1 : index
    %c0_49 = arith.constant 0 : index
    %c0_50 = arith.constant 0 : index
    %75 = vector.load %arg12[%c1_48, %c0_49, %c0_50] : memref<4x1x8xf32, #tpu.memory_space<vmem>>, vector<1x1x8xf32>
    %76 = vector.shape_cast %75 : vector<1x1x8xf32> to vector<1x8xf32>
    %77 = vector.broadcast %76 : vector<1x8xf32> to vector<8x8xf32>
    %78 = arith.addf %74, %77 : vector<8x8xf32>
    %c1_51 = arith.constant 1 : index
    %c0_52 = arith.constant 0 : index
    %c0_53 = arith.constant 0 : index
    %79 = vector.load %arg15[%c1_51, %c0_52, %c0_53] : memref<4x8x8xf32, #tpu.memory_space<vmem>>, vector<1x8x8xf32>
    %80 = vector.shape_cast %79 : vector<1x8x8xf32> to vector<8x8xf32>
    %81 = arith.truncf %80 : vector<8x8xf32> to vector<8x8xbf16>
    %82 = arith.truncf %71 : vector<8x8xf32> to vector<8x8xbf16>
    %cst_54 = arith.constant dense<0.000000e+00> : vector<8x8xf32>
    %83 = tpu.matmul %81, %82, %cst_54 {dimension_numbers = #tpu.dot_dimension_numbers<[1], [1], [0], [0], [0, 0, 1, 0], [], []>} : vector<8x8xbf16>, vector<8x8xbf16>, vector<8x8xf32> -> vector<8x8xf32>
    %c1_55 = arith.constant 1 : index
    %c0_56 = arith.constant 0 : index
    %c0_57 = arith.constant 0 : index
    %84 = vector.load %arg17[%c1_55, %c0_56, %c0_57] : memref<4x8x1xf32, #tpu.memory_space<vmem>>, vector<1x8x1xf32>
    %85 = vector.shape_cast %84 : vector<1x8x1xf32> to vector<8x1xf32>
    %cst_58 = arith.constant dense<0xFF800000> : vector<8xf32>
    %86 = vector.multi_reduction <maximumf>, %83, %cst_58 [1] : vector<8x8xf32> to vector<8xf32>
    %87 = vector.shape_cast %86 : vector<8xf32> to vector<8x1xf32>
    %88 = arith.maximumf %85, %87 : vector<8x1xf32>
    %89 = arith.subf %85, %88 : vector<8x1xf32>
    %90 = math.exp %89 : vector<8x1xf32>
    %91 = vector.broadcast %88 : vector<8x1xf32> to vector<8x8xf32>
    %92 = arith.subf %83, %91 : vector<8x8xf32>
    %93 = math.exp %92 : vector<8x8xf32>
    %c1_59 = arith.constant 1 : index
    %c0_60 = arith.constant 0 : index
    %c0_61 = arith.constant 0 : index
    %94 = vector.load %arg18[%c1_59, %c0_60, %c0_61] : memref<4x8x1xf32, #tpu.memory_space<vmem>>, vector<1x8x1xf32>
    %95 = vector.shape_cast %94 : vector<1x8x1xf32> to vector<8x1xf32>
    %96 = arith.mulf %90, %95 : vector<8x1xf32>
    %cst_62 = arith.constant dense<0.000000e+00> : vector<8xf32>
    %97 = vector.multi_reduction <add>, %93, %cst_62 [1] : vector<8x8xf32> to vector<8xf32>
    %98 = vector.shape_cast %97 : vector<8xf32> to vector<8x1xf32>
    %99 = arith.addf %96, %98 : vector<8x1xf32>
    %c1_63 = arith.constant 1 : index
    %c0_64 = arith.constant 0 : index
    %c0_65 = arith.constant 0 : index
    %100 = vector.load %arg18[%c1_63, %c0_64, %c0_65] : memref<4x8x1xf32, #tpu.memory_space<vmem>>, vector<1x8x1xf32>
    %101 = vector.shape_cast %100 : vector<1x8x1xf32> to vector<8x1xf32>
    %102 = vector.shape_cast %99 : vector<8x1xf32> to vector<1x8x1xf32>
    tpu.vector_store %arg18[%c1_63, %c0_64, %c0_65], %102 {strides = array<i32>} : memref<4x8x1xf32, #tpu.memory_space<vmem>>, vector<1x8x1xf32>,
    %c1_66 = arith.constant 1 : index
    %c0_67 = arith.constant 0 : index
    %c0_68 = arith.constant 0 : index
    %103 = vector.load %arg16[%c1_66, %c0_67, %c0_68] : memref<4x8x8xf32, #tpu.memory_space<vmem>>, vector<1x8x8xf32>
    %104 = vector.shape_cast %103 : vector<1x8x8xf32> to vector<8x8xf32>
    %105 = vector.broadcast %90 : vector<8x1xf32> to vector<8x8xf32>
    %106 = arith.mulf %105, %104 : vector<8x8xf32>
    %107 = arith.truncf %93 : vector<8x8xf32> to vector<8x8xbf16>
    %108 = arith.truncf %78 : vector<8x8xf32> to vector<8x8xbf16>
    %cst_69 = arith.constant dense<0.000000e+00> : vector<8x8xf32>
    %109 = tpu.matmul %107, %108, %cst_69 {dimension_numbers = #tpu.dot_dimension_numbers<[1], [0], [0], [1], [0, 0, 1, 1], [], []>} : vector<8x8xbf16>, vector<8x8xbf16>, vector<8x8xf32> -> vector<8x8xf32>
    %110 = arith.addf %106, %109 : vector<8x8xf32>
    %c1_70 = arith.constant 1 : index
    %c0_71 = arith.constant 0 : index
    %c0_72 = arith.constant 0 : index
    %111 = vector.load %arg16[%c1_70, %c0_71, %c0_72] : memref<4x8x8xf32, #tpu.memory_space<vmem>>, vector<1x8x8xf32>
    %112 = vector.shape_cast %111 : vector<1x8x8xf32> to vector<8x8xf32>
    %113 = vector.shape_cast %110 : vector<8x8xf32> to vector<1x8x8xf32>
    tpu.vector_store %arg16[%c1_70, %c0_71, %c0_72], %113 {strides = array<i32>} : memref<4x8x8xf32, #tpu.memory_space<vmem>>, vector<1x8x8xf32>,
    %c1_73 = arith.constant 1 : index
    %c0_74 = arith.constant 0 : index
    %c0_75 = arith.constant 0 : index
    %114 = vector.load %arg17[%c1_73, %c0_74, %c0_75] : memref<4x8x1xf32, #tpu.memory_space<vmem>>, vector<1x8x1xf32>
    %115 = vector.shape_cast %114 : vector<1x8x1xf32> to vector<8x1xf32>
    %116 = vector.shape_cast %88 : vector<8x1xf32> to vector<1x8x1xf32>
    tpu.vector_store %arg17[%c1_73, %c0_74, %c0_75], %116 {strides = array<i32>} : memref<4x8x1xf32, #tpu.memory_space<vmem>>, vector<1x8x1xf32>,
    %117 = vector.extract_strided_slice %10 {offsets = [2, 0, 0], sizes = [1, 32, 8], strides = [1, 1, 1]} : vector<4x32x8xbf16> to vector<1x32x8xbf16>
    %118 = vector.shape_cast %117 : vector<1x32x8xbf16> to vector<32x8xbf16>
    %cst_76 = arith.constant dense<0.000000e+00> : vector<8x8xf32>
    %119 = tpu.matmul %5, %118, %cst_76 {dimension_numbers = #tpu.dot_dimension_numbers<[1], [0], [0], [1], [0, 0, 1, 1], [], []>} : vector<8x32xbf16>, vector<32x8xbf16>, vector<8x8xf32> -> vector<8x8xf32>
    %c2 = arith.constant 2 : index
    %c0_77 = arith.constant 0 : index
    %c0_78 = arith.constant 0 : index
    %120 = vector.load %arg11[%c2, %c0_77, %c0_78] : memref<4x1x8xf32, #tpu.memory_space<vmem>>, vector<1x1x8xf32>
    %121 = vector.shape_cast %120 : vector<1x1x8xf32> to vector<1x8xf32>
    %122 = vector.broadcast %121 : vector<1x8xf32> to vector<8x8xf32>
    %123 = arith.addf %119, %122 : vector<8x8xf32>
    %124 = vector.extract_strided_slice %12 {offsets = [2, 0, 0], sizes = [1, 32, 8], strides = [1, 1, 1]} : vector<4x32x8xbf16> to vector<1x32x8xbf16>
    %125 = vector.shape_cast %124 : vector<1x32x8xbf16> to vector<32x8xbf16>
    %cst_79 = arith.constant dense<0.000000e+00> : vector<8x8xf32>
    %126 = tpu.matmul %8, %125, %cst_79 {dimension_numbers = #tpu.dot_dimension_numbers<[1], [0], [0], [1], [0, 0, 1, 1], [], []>} : vector<8x32xbf16>, vector<32x8xbf16>, vector<8x8xf32> -> vector<8x8xf32>
    %c2_80 = arith.constant 2 : index
    %c0_81 = arith.constant 0 : index
    %c0_82 = arith.constant 0 : index
    %127 = vector.load %arg12[%c2_80, %c0_81, %c0_82] : memref<4x1x8xf32, #tpu.memory_space<vmem>>, vector<1x1x8xf32>
    %128 = vector.shape_cast %127 : vector<1x1x8xf32> to vector<1x8xf32>
    %129 = vector.broadcast %128 : vector<1x8xf32> to vector<8x8xf32>
    %130 = arith.addf %126, %129 : vector<8x8xf32>
    %c2_83 = arith.constant 2 : index
    %c0_84 = arith.constant 0 : index
    %c0_85 = arith.constant 0 : index
    %131 = vector.load %arg15[%c2_83, %c0_84, %c0_85] : memref<4x8x8xf32, #tpu.memory_space<vmem>>, vector<1x8x8xf32>
    %132 = vector.shape_cast %131 : vector<1x8x8xf32> to vector<8x8xf32>
    %133 = arith.truncf %132 : vector<8x8xf32> to vector<8x8xbf16>
    %134 = arith.truncf %123 : vector<8x8xf32> to vector<8x8xbf16>
    %cst_86 = arith.constant dense<0.000000e+00> : vector<8x8xf32>
    %135 = tpu.matmul %133, %134, %cst_86 {dimension_numbers = #tpu.dot_dimension_numbers<[1], [1], [0], [0], [0, 0, 1, 0], [], []>} : vector<8x8xbf16>, vector<8x8xbf16>, vector<8x8xf32> -> vector<8x8xf32>
    %c2_87 = arith.constant 2 : index
    %c0_88 = arith.constant 0 : index
    %c0_89 = arith.constant 0 : index
    %136 = vector.load %arg17[%c2_87, %c0_88, %c0_89] : memref<4x8x1xf32, #tpu.memory_space<vmem>>, vector<1x8x1xf32>
    %137 = vector.shape_cast %136 : vector<1x8x1xf32> to vector<8x1xf32>
    %cst_90 = arith.constant dense<0xFF800000> : vector<8xf32>
    %138 = vector.multi_reduction <maximumf>, %135, %cst_90 [1] : vector<8x8xf32> to vector<8xf32>
    %139 = vector.shape_cast %138 : vector<8xf32> to vector<8x1xf32>
    %140 = arith.maximumf %137, %139 : vector<8x1xf32>
    %141 = arith.subf %137, %140 : vector<8x1xf32>
    %142 = math.exp %141 : vector<8x1xf32>
    %143 = vector.broadcast %140 : vector<8x1xf32> to vector<8x8xf32>
    %144 = arith.subf %135, %143 : vector<8x8xf32>
    %145 = math.exp %144 : vector<8x8xf32>
    %c2_91 = arith.constant 2 : index
    %c0_92 = arith.constant 0 : index
    %c0_93 = arith.constant 0 : index
    %146 = vector.load %arg18[%c2_91, %c0_92, %c0_93] : memref<4x8x1xf32, #tpu.memory_space<vmem>>, vector<1x8x1xf32>
    %147 = vector.shape_cast %146 : vector<1x8x1xf32> to vector<8x1xf32>
    %148 = arith.mulf %142, %147 : vector<8x1xf32>
    %cst_94 = arith.constant dense<0.000000e+00> : vector<8xf32>
    %149 = vector.multi_reduction <add>, %145, %cst_94 [1] : vector<8x8xf32> to vector<8xf32>
    %150 = vector.shape_cast %149 : vector<8xf32> to vector<8x1xf32>
    %151 = arith.addf %148, %150 : vector<8x1xf32>
    %c2_95 = arith.constant 2 : index
    %c0_96 = arith.constant 0 : index
    %c0_97 = arith.constant 0 : index
    %152 = vector.load %arg18[%c2_95, %c0_96, %c0_97] : memref<4x8x1xf32, #tpu.memory_space<vmem>>, vector<1x8x1xf32>
    %153 = vector.shape_cast %152 : vector<1x8x1xf32> to vector<8x1xf32>
    %154 = vector.shape_cast %151 : vector<8x1xf32> to vector<1x8x1xf32>
    tpu.vector_store %arg18[%c2_95, %c0_96, %c0_97], %154 {strides = array<i32>} : memref<4x8x1xf32, #tpu.memory_space<vmem>>, vector<1x8x1xf32>,
    %c2_98 = arith.constant 2 : index
    %c0_99 = arith.constant 0 : index
    %c0_100 = arith.constant 0 : index
    %155 = vector.load %arg16[%c2_98, %c0_99, %c0_100] : memref<4x8x8xf32, #tpu.memory_space<vmem>>, vector<1x8x8xf32>
    %156 = vector.shape_cast %155 : vector<1x8x8xf32> to vector<8x8xf32>
    %157 = vector.broadcast %142 : vector<8x1xf32> to vector<8x8xf32>
    %158 = arith.mulf %157, %156 : vector<8x8xf32>
    %159 = arith.truncf %145 : vector<8x8xf32> to vector<8x8xbf16>
    %160 = arith.truncf %130 : vector<8x8xf32> to vector<8x8xbf16>
    %cst_101 = arith.constant dense<0.000000e+00> : vector<8x8xf32>
    %161 = tpu.matmul %159, %160, %cst_101 {dimension_numbers = #tpu.dot_dimension_numbers<[1], [0], [0], [1], [0, 0, 1, 1], [], []>} : vector<8x8xbf16>, vector<8x8xbf16>, vector<8x8xf32> -> vector<8x8xf32>
    %162 = arith.addf %158, %161 : vector<8x8xf32>
    %c2_102 = arith.constant 2 : index
    %c0_103 = arith.constant 0 : index
    %c0_104 = arith.constant 0 : index
    %163 = vector.load %arg16[%c2_102, %c0_103, %c0_104] : memref<4x8x8xf32, #tpu.memory_space<vmem>>, vector<1x8x8xf32>
    %164 = vector.shape_cast %163 : vector<1x8x8xf32> to vector<8x8xf32>
    %165 = vector.shape_cast %162 : vector<8x8xf32> to vector<1x8x8xf32>
    tpu.vector_store %arg16[%c2_102, %c0_103, %c0_104], %165 {strides = array<i32>} : memref<4x8x8xf32, #tpu.memory_space<vmem>>, vector<1x8x8xf32>,
    %c2_105 = arith.constant 2 : index
    %c0_106 = arith.constant 0 : index
    %c0_107 = arith.constant 0 : index
    %166 = vector.load %arg17[%c2_105, %c0_106, %c0_107] : memref<4x8x1xf32, #tpu.memory_space<vmem>>, vector<1x8x1xf32>
    %167 = vector.shape_cast %166 : vector<1x8x1xf32> to vector<8x1xf32>
    %168 = vector.shape_cast %140 : vector<8x1xf32> to vector<1x8x1xf32>
    tpu.vector_store %arg17[%c2_105, %c0_106, %c0_107], %168 {strides = array<i32>} : memref<4x8x1xf32, #tpu.memory_space<vmem>>, vector<1x8x1xf32>,
    %169 = vector.extract_strided_slice %10 {offsets = [3, 0, 0], sizes = [1, 32, 8], strides = [1, 1, 1]} : vector<4x32x8xbf16> to vector<1x32x8xbf16>
    %170 = vector.shape_cast %169 : vector<1x32x8xbf16> to vector<32x8xbf16>
    %cst_108 = arith.constant dense<0.000000e+00> : vector<8x8xf32>
    %171 = tpu.matmul %5, %170, %cst_108 {dimension_numbers = #tpu.dot_dimension_numbers<[1], [0], [0], [1], [0, 0, 1, 1], [], []>} : vector<8x32xbf16>, vector<32x8xbf16>, vector<8x8xf32> -> vector<8x8xf32>
    %c3 = arith.constant 3 : index
    %c0_109 = arith.constant 0 : index
    %c0_110 = arith.constant 0 : index
    %172 = vector.load %arg11[%c3, %c0_109, %c0_110] : memref<4x1x8xf32, #tpu.memory_space<vmem>>, vector<1x1x8xf32>
    %173 = vector.shape_cast %172 : vector<1x1x8xf32> to vector<1x8xf32>
    %174 = vector.broadcast %173 : vector<1x8xf32> to vector<8x8xf32>
    %175 = arith.addf %171, %174 : vector<8x8xf32>
    %176 = vector.extract_strided_slice %12 {offsets = [3, 0, 0], sizes = [1, 32, 8], strides = [1, 1, 1]} : vector<4x32x8xbf16> to vector<1x32x8xbf16>
    %177 = vector.shape_cast %176 : vector<1x32x8xbf16> to vector<32x8xbf16>
    %cst_111 = arith.constant dense<0.000000e+00> : vector<8x8xf32>
    %178 = tpu.matmul %8, %177, %cst_111 {dimension_numbers = #tpu.dot_dimension_numbers<[1], [0], [0], [1], [0, 0, 1, 1], [], []>} : vector<8x32xbf16>, vector<32x8xbf16>, vector<8x8xf32> -> vector<8x8xf32>
    %c3_112 = arith.constant 3 : index
    %c0_113 = arith.constant 0 : index
    %c0_114 = arith.constant 0 : index
    %179 = vector.load %arg12[%c3_112, %c0_113, %c0_114] : memref<4x1x8xf32, #tpu.memory_space<vmem>>, vector<1x1x8xf32>
    %180 = vector.shape_cast %179 : vector<1x1x8xf32> to vector<1x8xf32>
    %181 = vector.broadcast %180 : vector<1x8xf32> to vector<8x8xf32>
    %182 = arith.addf %178, %181 : vector<8x8xf32>
    %c3_115 = arith.constant 3 : index
    %c0_116 = arith.constant 0 : index
    %c0_117 = arith.constant 0 : index
    %183 = vector.load %arg15[%c3_115, %c0_116, %c0_117] : memref<4x8x8xf32, #tpu.memory_space<vmem>>, vector<1x8x8xf32>
    %184 = vector.shape_cast %183 : vector<1x8x8xf32> to vector<8x8xf32>
    %185 = arith.truncf %184 : vector<8x8xf32> to vector<8x8xbf16>
    %186 = arith.truncf %175 : vector<8x8xf32> to vector<8x8xbf16>
    %cst_118 = arith.constant dense<0.000000e+00> : vector<8x8xf32>
    %187 = tpu.matmul %185, %186, %cst_118 {dimension_numbers = #tpu.dot_dimension_numbers<[1], [1], [0], [0], [0, 0, 1, 0], [], []>} : vector<8x8xbf16>, vector<8x8xbf16>, vector<8x8xf32> -> vector<8x8xf32>
    %c3_119 = arith.constant 3 : index
    %c0_120 = arith.constant 0 : index
    %c0_121 = arith.constant 0 : index
    %188 = vector.load %arg17[%c3_119, %c0_120, %c0_121] : memref<4x8x1xf32, #tpu.memory_space<vmem>>, vector<1x8x1xf32>
    %189 = vector.shape_cast %188 : vector<1x8x1xf32> to vector<8x1xf32>
    %cst_122 = arith.constant dense<0xFF800000> : vector<8xf32>
    %190 = vector.multi_reduction <maximumf>, %187, %cst_122 [1] : vector<8x8xf32> to vector<8xf32>
    %191 = vector.shape_cast %190 : vector<8xf32> to vector<8x1xf32>
    %192 = arith.maximumf %189, %191 : vector<8x1xf32>
    %193 = arith.subf %189, %192 : vector<8x1xf32>
    %194 = math.exp %193 : vector<8x1xf32>
    %195 = vector.broadcast %192 : vector<8x1xf32> to vector<8x8xf32>
    %196 = arith.subf %187, %195 : vector<8x8xf32>
    %197 = math.exp %196 : vector<8x8xf32>
    %c3_123 = arith.constant 3 : index
    %c0_124 = arith.constant 0 : index
    %c0_125 = arith.constant 0 : index
    %198 = vector.load %arg18[%c3_123, %c0_124, %c0_125] : memref<4x8x1xf32, #tpu.memory_space<vmem>>, vector<1x8x1xf32>
    %199 = vector.shape_cast %198 : vector<1x8x1xf32> to vector<8x1xf32>
    %200 = arith.mulf %194, %199 : vector<8x1xf32>
    %cst_126 = arith.constant dense<0.000000e+00> : vector<8xf32>
    %201 = vector.multi_reduction <add>, %197, %cst_126 [1] : vector<8x8xf32> to vector<8xf32>
    %202 = vector.shape_cast %201 : vector<8xf32> to vector<8x1xf32>
    %203 = arith.addf %200, %202 : vector<8x1xf32>
    %c3_127 = arith.constant 3 : index
    %c0_128 = arith.constant 0 : index
    %c0_129 = arith.constant 0 : index
    %204 = vector.load %arg18[%c3_127, %c0_128, %c0_129] : memref<4x8x1xf32, #tpu.memory_space<vmem>>, vector<1x8x1xf32>
    %205 = vector.shape_cast %204 : vector<1x8x1xf32> to vector<8x1xf32>
    %206 = vector.shape_cast %203 : vector<8x1xf32> to vector<1x8x1xf32>
    tpu.vector_store %arg18[%c3_127, %c0_128, %c0_129], %206 {strides = array<i32>} : memref<4x8x1xf32, #tpu.memory_space<vmem>>, vector<1x8x1xf32>,
    %c3_130 = arith.constant 3 : index
    %c0_131 = arith.constant 0 : index
    %c0_132 = arith.constant 0 : index
    %207 = vector.load %arg16[%c3_130, %c0_131, %c0_132] : memref<4x8x8xf32, #tpu.memory_space<vmem>>, vector<1x8x8xf32>
    %208 = vector.shape_cast %207 : vector<1x8x8xf32> to vector<8x8xf32>
    %209 = vector.broadcast %194 : vector<8x1xf32> to vector<8x8xf32>
    %210 = arith.mulf %209, %208 : vector<8x8xf32>
    %211 = arith.truncf %197 : vector<8x8xf32> to vector<8x8xbf16>
    %212 = arith.truncf %182 : vector<8x8xf32> to vector<8x8xbf16>
    %cst_133 = arith.constant dense<0.000000e+00> : vector<8x8xf32>
    %213 = tpu.matmul %211, %212, %cst_133 {dimension_numbers = #tpu.dot_dimension_numbers<[1], [0], [0], [1], [0, 0, 1, 1], [], []>} : vector<8x8xbf16>, vector<8x8xbf16>, vector<8x8xf32> -> vector<8x8xf32>
    %214 = arith.addf %210, %213 : vector<8x8xf32>
    %c3_134 = arith.constant 3 : index
    %c0_135 = arith.constant 0 : index
    %c0_136 = arith.constant 0 : index
    %215 = vector.load %arg16[%c3_134, %c0_135, %c0_136] : memref<4x8x8xf32, #tpu.memory_space<vmem>>, vector<1x8x8xf32>
    %216 = vector.shape_cast %215 : vector<1x8x8xf32> to vector<8x8xf32>
    %217 = vector.shape_cast %214 : vector<8x8xf32> to vector<1x8x8xf32>
    tpu.vector_store %arg16[%c3_134, %c0_135, %c0_136], %217 {strides = array<i32>} : memref<4x8x8xf32, #tpu.memory_space<vmem>>, vector<1x8x8xf32>,
    %c3_137 = arith.constant 3 : index
    %c0_138 = arith.constant 0 : index
    %c0_139 = arith.constant 0 : index
    %218 = vector.load %arg17[%c3_137, %c0_138, %c0_139] : memref<4x8x1xf32, #tpu.memory_space<vmem>>, vector<1x8x1xf32>
    %219 = vector.shape_cast %218 : vector<1x8x1xf32> to vector<8x1xf32>
    %220 = vector.shape_cast %192 : vector<8x1xf32> to vector<1x8x1xf32>
    tpu.vector_store %arg17[%c3_137, %c0_138, %c0_139], %220 {strides = array<i32>} : memref<4x8x1xf32, #tpu.memory_space<vmem>>, vector<1x8x1xf32>,
    %c0_i32_140 = arith.constant 0 : i32
    %221 = arith.cmpi eq, %arg2, %c0_i32_140 : i32
    %222 = arith.extui %221 : i1 to i32
    %c0_i32_141 = arith.constant 0 : i32
    %223 = arith.cmpi ne, %222, %c0_i32_141 : i32
    scf.if %223 {
      %c0_142 = arith.constant 0 : index
      %c0_143 = arith.constant 0 : index
      %c0_144 = arith.constant 0 : index
      %224 = vector.load %arg9[%c0_142, %c0_143, %c0_144] : memref<4x8x32xf32, #tpu.memory_space<vmem>>, vector<4x8x32xf32>
      %225 = arith.truncf %224 : vector<4x8x32xf32> to vector<4x8x32xbf16>
      %cst_145 = arith.constant 0.000000e+00 : f32
      %226 = vector.broadcast %cst_145 : f32 to vector<8x32xf32>
      %c0_146 = arith.constant 0 : index
      %c0_147 = arith.constant 0 : index
      %c0_148 = arith.constant 0 : index
      %227 = vector.load %arg18[%c0_146, %c0_147, %c0_148] : memref<4x8x1xf32, #tpu.memory_space<vmem>>, vector<1x8x1xf32>
      %228 = vector.shape_cast %227 : vector<1x8x1xf32> to vector<8x1xf32>
      %229 = tpu.reciprocal %228 {approx = true} : vector<8x1xf32> -> vector<8x1xf32>
      %c0_149 = arith.constant 0 : index
      %c0_150 = arith.constant 0 : index
      %c0_151 = arith.constant 0 : index
      %230 = vector.load %arg16[%c0_149, %c0_150, %c0_151] : memref<4x8x8xf32, #tpu.memory_space<vmem>>, vector<1x8x8xf32>
      %231 = vector.shape_cast %230 : vector<1x8x8xf32> to vector<8x8xf32>
      %232 = vector.broadcast %229 : vector<8x1xf32> to vector<8x8xf32>
      %233 = arith.mulf %231, %232 : vector<8x8xf32>
      %234 = arith.truncf %233 : vector<8x8xf32> to vector<8x8xbf16>
      %235 = vector.extract_strided_slice %225 {offsets = [0, 0, 0], sizes = [1, 8, 32], strides = [1, 1, 1]} : vector<4x8x32xbf16> to vector<1x8x32xbf16>
      %236 = vector.shape_cast %235 : vector<1x8x32xbf16> to vector<8x32xbf16>
      %cst_152 = arith.constant dense<0.000000e+00> : vector<8x32xf32>
      %237 = tpu.matmul %234, %236, %cst_152 {dimension_numbers = #tpu.dot_dimension_numbers<[1], [0], [0], [1], [0, 0, 1, 1], [], []>} : vector<8x8xbf16>, vector<8x32xbf16>, vector<8x32xf32> -> vector<8x32xf32>
      %238 = arith.addf %226, %237 : vector<8x32xf32>
      %c1_153 = arith.constant 1 : index
      %c0_154 = arith.constant 0 : index
      %c0_155 = arith.constant 0 : index
      %239 = vector.load %arg18[%c1_153, %c0_154, %c0_155] : memref<4x8x1xf32, #tpu.memory_space<vmem>>, vector<1x8x1xf32>
      %240 = vector.shape_cast %239 : vector<1x8x1xf32> to vector<8x1xf32>
      %241 = tpu.reciprocal %240 {approx = true} : vector<8x1xf32> -> vector<8x1xf32>
      %c1_156 = arith.constant 1 : index
      %c0_157 = arith.constant 0 : index
      %c0_158 = arith.constant 0 : index
      %242 = vector.load %arg16[%c1_156, %c0_157, %c0_158] : memref<4x8x8xf32, #tpu.memory_space<vmem>>, vector<1x8x8xf32>
      %243 = vector.shape_cast %242 : vector<1x8x8xf32> to vector<8x8xf32>
      %244 = vector.broadcast %241 : vector<8x1xf32> to vector<8x8xf32>
      %245 = arith.mulf %243, %244 : vector<8x8xf32>
      %246 = arith.truncf %245 : vector<8x8xf32> to vector<8x8xbf16>
      %247 = vector.extract_strided_slice %225 {offsets = [1, 0, 0], sizes = [1, 8, 32], strides = [1, 1, 1]} : vector<4x8x32xbf16> to vector<1x8x32xbf16>
      %248 = vector.shape_cast %247 : vector<1x8x32xbf16> to vector<8x32xbf16>
      %cst_159 = arith.constant dense<0.000000e+00> : vector<8x32xf32>
      %249 = tpu.matmul %246, %248, %cst_159 {dimension_numbers = #tpu.dot_dimension_numbers<[1], [0], [0], [1], [0, 0, 1, 1], [], []>} : vector<8x8xbf16>, vector<8x32xbf16>, vector<8x32xf32> -> vector<8x32xf32>
      %250 = arith.addf %238, %249 : vector<8x32xf32>
      %c2_160 = arith.constant 2 : index
      %c0_161 = arith.constant 0 : index
      %c0_162 = arith.constant 0 : index
      %251 = vector.load %arg18[%c2_160, %c0_161, %c0_162] : memref<4x8x1xf32, #tpu.memory_space<vmem>>, vector<1x8x1xf32>
      %252 = vector.shape_cast %251 : vector<1x8x1xf32> to vector<8x1xf32>
      %253 = tpu.reciprocal %252 {approx = true} : vector<8x1xf32> -> vector<8x1xf32>
      %c2_163 = arith.constant 2 : index
      %c0_164 = arith.constant 0 : index
      %c0_165 = arith.constant 0 : index
      %254 = vector.load %arg16[%c2_163, %c0_164, %c0_165] : memref<4x8x8xf32, #tpu.memory_space<vmem>>, vector<1x8x8xf32>
      %255 = vector.shape_cast %254 : vector<1x8x8xf32> to vector<8x8xf32>
      %256 = vector.broadcast %253 : vector<8x1xf32> to vector<8x8xf32>
      %257 = arith.mulf %255, %256 : vector<8x8xf32>
      %258 = arith.truncf %257 : vector<8x8xf32> to vector<8x8xbf16>
      %259 = vector.extract_strided_slice %225 {offsets = [2, 0, 0], sizes = [1, 8, 32], strides = [1, 1, 1]} : vector<4x8x32xbf16> to vector<1x8x32xbf16>
      %260 = vector.shape_cast %259 : vector<1x8x32xbf16> to vector<8x32xbf16>
      %cst_166 = arith.constant dense<0.000000e+00> : vector<8x32xf32>
      %261 = tpu.matmul %258, %260, %cst_166 {dimension_numbers = #tpu.dot_dimension_numbers<[1], [0], [0], [1], [0, 0, 1, 1], [], []>} : vector<8x8xbf16>, vector<8x32xbf16>, vector<8x32xf32> -> vector<8x32xf32>
      %262 = arith.addf %250, %261 : vector<8x32xf32>
      %c3_167 = arith.constant 3 : index
      %c0_168 = arith.constant 0 : index
      %c0_169 = arith.constant 0 : index
      %263 = vector.load %arg18[%c3_167, %c0_168, %c0_169] : memref<4x8x1xf32, #tpu.memory_space<vmem>>, vector<1x8x1xf32>
      %264 = vector.shape_cast %263 : vector<1x8x1xf32> to vector<8x1xf32>
      %265 = tpu.reciprocal %264 {approx = true} : vector<8x1xf32> -> vector<8x1xf32>
      %c3_170 = arith.constant 3 : index
      %c0_171 = arith.constant 0 : index
      %c0_172 = arith.constant 0 : index
      %266 = vector.load %arg16[%c3_170, %c0_171, %c0_172] : memref<4x8x8xf32, #tpu.memory_space<vmem>>, vector<1x8x8xf32>
      %267 = vector.shape_cast %266 : vector<1x8x8xf32> to vector<8x8xf32>
      %268 = vector.broadcast %265 : vector<8x1xf32> to vector<8x8xf32>
      %269 = arith.mulf %267, %268 : vector<8x8xf32>
      %270 = arith.truncf %269 : vector<8x8xf32> to vector<8x8xbf16>
      %271 = vector.extract_strided_slice %225 {offsets = [3, 0, 0], sizes = [1, 8, 32], strides = [1, 1, 1]} : vector<4x8x32xbf16> to vector<1x8x32xbf16>
      %272 = vector.shape_cast %271 : vector<1x8x32xbf16> to vector<8x32xbf16>
      %cst_173 = arith.constant dense<0.000000e+00> : vector<8x32xf32>
      %273 = tpu.matmul %270, %272, %cst_173 {dimension_numbers = #tpu.dot_dimension_numbers<[1], [0], [0], [1], [0, 0, 1, 1], [], []>} : vector<8x8xbf16>, vector<8x32xbf16>, vector<8x32xf32> -> vector<8x32xf32>
      %274 = arith.addf %262, %273 : vector<8x32xf32>
      %c0_174 = arith.constant 0 : index
      %c0_175 = arith.constant 0 : index
      %275 = vector.load %arg13[%c0_174, %c0_175] : memref<1x32xf32, #tpu.memory_space<vmem>>, vector<1x32xf32>
      %276 = vector.broadcast %275 : vector<1x32xf32> to vector<8x32xf32>
      %277 = arith.addf %274, %276 : vector<8x32xf32>
      %c0_176 = arith.constant 0 : index
      %c0_177 = arith.constant 0 : index
      %c0_178 = arith.constant 0 : index
      %278 = vector.load %arg14[%c0_176, %c0_177, %c0_178] : memref<1x8x32xf32, #tpu.memory_space<vmem>>, vector<1x8x32xf32>
      %279 = vector.shape_cast %278 : vector<1x8x32xf32> to vector<8x32xf32>
      %280 = vector.shape_cast %277 : vector<8x32xf32> to vector<1x8x32xf32>
      tpu.vector_store %arg14[%c0_176, %c0_177, %c0_178], %280 {strides = array<i32>} : memref<1x8x32xf32, #tpu.memory_space<vmem>>, vector<1x8x32xf32>,
    } else {
    }
    return
  }
  func.func @transform_0(%arg0: i32, %arg1: i32, %arg2: i32) -> (i32, i32, i32) {
    %c0_i32 = arith.constant 0 : i32
    %c0_i32_0 = arith.constant 0 : i32
    return %arg0, %arg1, %c0_i32 : i32, i32, i32
  }
  func.func @transform_1(%arg0: i32, %arg1: i32, %arg2: i32) -> (i32, i32, i32) {
    %c0_i32 = arith.constant 0 : i32
    %c0_i32_0 = arith.constant 0 : i32
    return %arg0, %arg2, %c0_i32 : i32, i32, i32
  }
  func.func @transform_2(%arg0: i32, %arg1: i32, %arg2: i32) -> (i32, i32, i32) {
    %c0_i32 = arith.constant 0 : i32
    %c0_i32_0 = arith.constant 0 : i32
    return %arg0, %arg2, %c0_i32 : i32, i32, i32
  }
  func.func @transform_3(%arg0: i32, %arg1: i32, %arg2: i32) -> (i32, i32, i32) {
    %c0_i32 = arith.constant 0 : i32
    %c0_i32_0 = arith.constant 0 : i32
    %c0_i32_1 = arith.constant 0 : i32
    %c0_i32_2 = arith.constant 0 : i32
    return %c0_i32, %c0_i32_0, %c0_i32_1 : i32, i32, i32
  }
  func.func @transform_4(%arg0: i32, %arg1: i32, %arg2: i32) -> (i32, i32, i32) {
    %c0_i32 = arith.constant 0 : i32
    %c0_i32_0 = arith.constant 0 : i32
    %c0_i32_1 = arith.constant 0 : i32
    %c0_i32_2 = arith.constant 0 : i32
    return %c0_i32, %c0_i32_0, %c0_i32_1 : i32, i32, i32
  }
  func.func @transform_5(%arg0: i32, %arg1: i32, %arg2: i32) -> (i32, i32, i32) {
    %c0_i32 = arith.constant 0 : i32
    %c0_i32_0 = arith.constant 0 : i32
    %c0_i32_1 = arith.constant 0 : i32
    %c0_i32_2 = arith.constant 0 : i32
    return %c0_i32, %c0_i32_0, %c0_i32_1 : i32, i32, i32
  }
  func.func @transform_6(%arg0: i32, %arg1: i32, %arg2: i32) -> (i32, i32, i32) {
    %c0_i32 = arith.constant 0 : i32
    %c0_i32_0 = arith.constant 0 : i32
    %c0_i32_1 = arith.constant 0 : i32
    %c0_i32_2 = arith.constant 0 : i32
    return %c0_i32, %c0_i32_0, %c0_i32_1 : i32, i32, i32
  }
  func.func @transform_7(%arg0: i32, %arg1: i32, %arg2: i32) -> (i32, i32, i32) {
    %c0_i32 = arith.constant 0 : i32
    %c0_i32_0 = arith.constant 0 : i32
    %c0_i32_1 = arith.constant 0 : i32
    %c0_i32_2 = arith.constant 0 : i32
    return %c0_i32, %c0_i32_0, %c0_i32_1 : i32, i32, i32
  }
  func.func @transform_8(%arg0: i32, %arg1: i32, %arg2: i32) -> (i32, i32, i32) {
    %c0_i32 = arith.constant 0 : i32
    %c0_i32_0 = arith.constant 0 : i32
    %c0_i32_1 = arith.constant 0 : i32
    %c0_i32_2 = arith.constant 0 : i32
    return %c0_i32, %c0_i32_0, %c0_i32_1 : i32, i32, i32
  }
  func.func @transform_9(%arg0: i32, %arg1: i32, %arg2: i32) -> (i32, i32, i32) {
    %c0_i32 = arith.constant 0 : i32
    %c0_i32_0 = arith.constant 0 : i32
    %c0_i32_1 = arith.constant 0 : i32
    %c0_i32_2 = arith.constant 0 : i32
    return %c0_i32, %c0_i32_0, %c0_i32_1 : i32, i32, i32
  }
  func.func @transform_10(%arg0: i32, %arg1: i32, %arg2: i32) -> (i32, i32) {
    %c0_i32 = arith.constant 0 : i32
    %c0_i32_0 = arith.constant 0 : i32
    %c0_i32_1 = arith.constant 0 : i32
    return %c0_i32, %c0_i32_0 : i32, i32
  }
  func.func @transform_11(%arg0: i32, %arg1: i32, %arg2: i32) -> (i32, i32, i32) {
    %c0_i32 = arith.constant 0 : i32
    %c0_i32_0 = arith.constant 0 : i32
    return %arg0, %arg1, %c0_i32 : i32, i32, i32
  }
}

</mosaic_0001>

<llo_original>
// kernel: tpu_custom_call.1
$region0: #{tpu_custom_call.1}
  #allocation0 [shape = 'u32[]', space=smem, size = 0x4, offset = 0x4, fixed_abs, tag = 'smem constant byte address 0x4 - core index']
  #allocation1 [shape = 'u32[144,128]{1,0:T(1,128)}', space=vmem, size = 0x12000, scoped, tag = 'internal scratch']
  #allocation2 [shape = 'f32[4,8,8]{2,1,0:T(8,128)}', space=vmem, size = 0x4000, scoped, tag = 'scratch operand']
  #allocation3 [shape = 'f32[4,8,8]{2,1,0:T(8,128)}', space=vmem, size = 0x4000, scoped, tag = 'scratch operand']
  #allocation4 [shape = 'f32[4,8,1]{2,1,0:T(8,128)}', space=vmem, size = 0x4000, scoped, tag = 'scratch operand']
  #allocation5 [shape = 'f32[4,8,1]{2,1,0:T(8,128)}', space=vmem, size = 0x4000, scoped, tag = 'scratch operand']
  %s0 = inlined_call_operand.vmem [shape: f32[2,8,32], index: 0, kind: input, shape index: {}]
  %s1 = inlined_call_operand.vmem [shape: f32[2,8,32], index: 1, kind: input, shape index: {}]
  %s2 = inlined_call_operand.vmem [shape: f32[2,8,32], index: 2, kind: input, shape index: {}]
  %s3 = inlined_call_operand.vmem [shape: f32[4,32,8], index: 3, kind: input, shape index: {}]
  %s4 = inlined_call_operand.vmem [shape: f32[4,32,8], index: 4, kind: input, shape index: {}]
  %s5 = inlined_call_operand.vmem [shape: f32[4,32,8], index: 5, kind: input, shape index: {}]
  %s6 = inlined_call_operand.vmem [shape: f32[4,8,32], index: 6, kind: input, shape index: {}]
  %s7 = inlined_call_operand.vmem [shape: f32[4,1,8], index: 7, kind: input, shape index: {}]
  %s8 = inlined_call_operand.vmem [shape: f32[4,1,8], index: 8, kind: input, shape index: {}]
  %s9 = inlined_call_operand.vmem [shape: f32[4,1,8], index: 9, kind: input, shape index: {}]
  %s10 = inlined_call_operand.vmem [shape: f32[1,32], index: 10, kind: input, shape index: {}]
  %s11 = inlined_call_operand.hbm [shape: f32[2,8,32], index: 11, kind: output, shape index: {}]
  %s12 = sld [smem:[#allocation0]]
  $region85: #{tpu_custom_call.1} parent=0
    _
  %s14 = ssub.s32 1, %s12
  %s15 = scalar_select 0, %s14, %s12
  $region1: #{tpu_custom_call.1} parent=0
    #allocation6 [shape = 'u8[8192]{0}', space=vmem, size = 0x2000, scoped, tag = 'output window, operand 0']
    #allocation7 [shape = 's32[2]{0}', space=sflag, size = 0x8, scoped, tag = 'scoped memory for tpu_custom_call.1']
    %16 = vsyncpa [#allocation7], 0
    %s17 = scalar_lea.sflag [#allocation7], 1
    %18 = vsyncpa %s17, 0
    loop: start=0, step=1, limit=4
    $region2: #{tpu_custom_call.1} parent=1 // loop_pre_header
      _
    $region3: #{tpu_custom_call.1} parent=1 // loop_header
      %s20 = sphi 0, %s24
      %p21 = scmp.ge.s32.totalorder %s20, 4
      %s27 = sphi 0, %s46
      %s28 = sphi 0, %s42
      %s29 = sphi 0, %s38
      %s30 = sphi 0, %s27
      %s31 = sphi 0, %s28
      %s32 = sphi 0, %s29
      %s33 = sphi 0, %s30
      %s34 = sphi 0, %s31
      %s35 = sphi 0, %s32
      %s51 = sphi 0, %s53
      %s54 = sphi 0, %s51
      %s55 = sphi 0, %s54
      %s71 = sphi 0, %s55
      %s79 = sphi 0, %s81
      %s82 = sphi 0, %s79
      %s83 = sphi 0, %s82
      %s99 = sphi 0, %s83
      %s107 = sphi 0, %s109
      %s110 = sphi 0, %s107
      %s111 = sphi 0, %s110
      %s127 = sphi 0, %s111
      %s131 = sphi 0, %s131
      %s133 = sphi 0, %s131
      %s134 = sphi 0, %s133
      %s148 = sphi 0, %s134
      %s152 = sphi 0, %s152
      %s154 = sphi 0, %s152
      %s155 = sphi 0, %s154
      %s169 = sphi 0, %s155
      %s173 = sphi 0, %s173
      %s175 = sphi 0, %s173
      %s176 = sphi 0, %s175
      %s190 = sphi 0, %s176
      %s194 = sphi 0, %s194
      %s196 = sphi 0, %s194
      %s197 = sphi 0, %s196
      %s211 = sphi 0, %s197
      %s215 = sphi 0, %s215
      %s217 = sphi 0, %s215
      %s218 = sphi 0, %s217
      %s232 = sphi 0, %s218
      %s236 = sphi 0, %s236
      %s238 = sphi 0, %s236
      %s239 = sphi 0, %s238
      %s253 = sphi 0, %s239
      %s257 = sphi 0, %s257
      %s259 = sphi 0, %s257
      %s260 = sphi 0, %s259
      %s274 = sphi 0, %s260
      %s278 = sphi 0, %s278
      %s280 = sphi 0, %s278
      %s281 = sphi 0, %s280
      %s295 = sphi 0, %s281
      %s303 = sphi 0, %s305
      %s306 = sphi 0, %s303
      %s307 = sphi 0, %s306
      %s323 = sphi 0, %s307
    $region4: #{tpu_custom_call.1} parent=1 // loop_header_branch
      %23 = sbr.rel (%p21) target = $region8
    $region5: #{tpu_custom_call.1} parent=1 // loop_body
      %s25 = ssub.s32 %s20, 1
      %s26 = ssub.s32 %s20, 2
      %s36 = sadd.s32 1, %s29
      %p37 = scmp.ge.s32.totalorder %s36, 1
      %s38 = scalar_select %p37, 0, %s36
      %s39 = sadd.s32 1, %s28
      %s40 = scalar_select %p37, %s39, %s28
      %p41 = scmp.ge.s32.totalorder %s40, 1
      %s42 = scalar_select %p41, 0, %s40
      %s43 = sadd.s32 1, %s27
      %s44 = scalar_select %p41, %s43, %s27
      %p45 = scmp.ge.s32.totalorder %s44, 2
      %s46 = scalar_select %p45, 0, %s44
      %s47 = ssub.s32 %s27, %s46
      %s48 = ssub.s32 %s28, %s42
      %s49 = sor.u32 %s47, %s48
      %p50 = scmp.eq.s32.totalorder %s49, 0
      %s52 = sadd.s32 %s51, 1
      %s53 = scalar_select %p50, %s51, %s52
      %p56 = pneg %p50
      %p57 = scmp.eq.s32.totalorder %s20, 1
      %p58 = por %p56, %p57
      %p59 = scmp.ne.s32.totalorder %s51, %s54
      %p60 = scmp.eq.s32.totalorder %s20, 0
      %p61 = por %p59, %p60
      %p62 = scmp.ne.s32.totalorder %s51, %s54
      %p63 = scmp.eq.s32.totalorder %s25, 1
      %p64 = por %p62, %p63
      %p65 = scmp.ne.s32.totalorder %s54, %s55
      %p66 = scmp.eq.s32.totalorder %s25, 0
      %p67 = por %p65, %p66
      %p68 = scmp.ne.s32.totalorder %s54, %s55
      %p69 = scmp.eq.s32.totalorder %s26, 1
      %p70 = por %p68, %p69
      %p72 = scmp.ne.s32.totalorder %s55, %s71
      %p73 = scmp.eq.s32.totalorder %s26, 0
      %p74 = por %p72, %p73
      %s75 = ssub.s32 %s27, %s46
      %s76 = ssub.s32 %s29, %s38
      %s77 = sor.u32 %s75, %s76
      %p78 = scmp.eq.s32.totalorder %s77, 0
      %s80 = sadd.s32 %s79, 1
      %s81 = scalar_select %p78, %s79, %s80
      %p84 = pneg %p78
      %p85 = scmp.eq.s32.totalorder %s20, 1
      %p86 = por %p84, %p85
      %p87 = scmp.ne.s32.totalorder %s79, %s82
      %p88 = scmp.eq.s32.totalorder %s20, 0
      %p89 = por %p87, %p88
      %p90 = scmp.ne.s32.totalorder %s79, %s82
      %p91 = scmp.eq.s32.totalorder %s25, 1
      %p92 = por %p90, %p91
      %p93 = scmp.ne.s32.totalorder %s82, %s83
      %p94 = scmp.eq.s32.totalorder %s25, 0
      %p95 = por %p93, %p94
      %p96 = scmp.ne.s32.totalorder %s82, %s83
      %p97 = scmp.eq.s32.totalorder %s26, 1
      %p98 = por %p96, %p97
      %p100 = scmp.ne.s32.totalorder %s83, %s99
      %p101 = scmp.eq.s32.totalorder %s26, 0
      %p102 = por %p100, %p101
      %s103 = ssub.s32 %s27, %s46
      %s104 = ssub.s32 %s29, %s38
      %s105 = sor.u32 %s103, %s104
      %p106 = scmp.eq.s32.totalorder %s105, 0
      %s108 = sadd.s32 %s107, 1
      %s109 = scalar_select %p106, %s107, %s108
      %p112 = pneg %p106
      %p113 = scmp.eq.s32.totalorder %s20, 1
      %p114 = por %p112, %p113
      %p115 = scmp.ne.s32.totalorder %s107, %s110
      %p116 = scmp.eq.s32.totalorder %s20, 0
      %p117 = por %p115, %p116
      %p118 = scmp.ne.s32.totalorder %s107, %s110
      %p119 = scmp.eq.s32.totalorder %s25, 1
      %p120 = por %p118, %p119
      %p121 = scmp.ne.s32.totalorder %s110, %s111
      %p122 = scmp.eq.s32.totalorder %s25, 0
      %p123 = por %p121, %p122
      %p124 = scmp.ne.s32.totalorder %s110, %s111
      %p125 = scmp.eq.s32.totalorder %s26, 1
      %p126 = por %p124, %p125
      %p128 = scmp.ne.s32.totalorder %s111, %s127
      %p129 = scmp.eq.s32.totalorder %s26, 0
      %p130 = por %p128, %p129
      %s132 = sadd.s32 %s131, 1
      %p135 = scmp.eq.s32.totalorder %s20, 1
      %p136 = scmp.ne.s32.totalorder %s131, %s133
      %p137 = scmp.eq.s32.totalorder %s20, 0
      %p138 = por %p136, %p137
      %p139 = scmp.ne.s32.totalorder %s131, %s133
      %p140 = scmp.eq.s32.totalorder %s25, 1
      %p141 = por %p139, %p140
      %p142 = scmp.ne.s32.totalorder %s133, %s134
      %p143 = scmp.eq.s32.totalorder %s25, 0
      %p144 = por %p142, %p143
      %p145 = scmp.ne.s32.totalorder %s133, %s134
      %p146 = scmp.eq.s32.totalorder %s26, 1
      %p147 = por %p145, %p146
      %p149 = scmp.ne.s32.totalorder %s134, %s148
      %p150 = scmp.eq.s32.totalorder %s26, 0
      %p151 = por %p149, %p150
      %s153 = sadd.s32 %s152, 1
      %p156 = scmp.eq.s32.totalorder %s20, 1
      %p157 = scmp.ne.s32.totalorder %s152, %s154
      %p158 = scmp.eq.s32.totalorder %s20, 0
      %p159 = por %p157, %p158
      %p160 = scmp.ne.s32.totalorder %s152, %s154
      %p161 = scmp.eq.s32.totalorder %s25, 1
      %p162 = por %p160, %p161
      %p163 = scmp.ne.s32.totalorder %s154, %s155
      %p164 = scmp.eq.s32.totalorder %s25, 0
      %p165 = por %p163, %p164
      %p166 = scmp.ne.s32.totalorder %s154, %s155
      %p167 = scmp.eq.s32.totalorder %s26, 1
      %p168 = por %p166, %p167
      %p170 = scmp.ne.s32.totalorder %s155, %s169
      %p171 = scmp.eq.s32.totalorder %s26, 0
      %p172 = por %p170, %p171
      %s174 = sadd.s32 %s173, 1
      %p177 = scmp.eq.s32.totalorder %s20, 1
      %p178 = scmp.ne.s32.totalorder %s173, %s175
      %p179 = scmp.eq.s32.totalorder %s20, 0
      %p180 = por %p178, %p179
      %p181 = scmp.ne.s32.totalorder %s173, %s175
      %p182 = scmp.eq.s32.totalorder %s25, 1
      %p183 = por %p181, %p182
      %p184 = scmp.ne.s32.totalorder %s175, %s176
      %p185 = scmp.eq.s32.totalorder %s25, 0
      %p186 = por %p184, %p185
      %p187 = scmp.ne.s32.totalorder %s175, %s176
      %p188 = scmp.eq.s32.totalorder %s26, 1
      %p189 = por %p187, %p188
      %p191 = scmp.ne.s32.totalorder %s176, %s190
      %p192 = scmp.eq.s32.totalorder %s26, 0
      %p193 = por %p191, %p192
      %s195 = sadd.s32 %s194, 1
      %p198 = scmp.eq.s32.totalorder %s20, 1
      %p199 = scmp.ne.s32.totalorder %s194, %s196
      %p200 = scmp.eq.s32.totalorder %s20, 0
      %p201 = por %p199, %p200
      %p202 = scmp.ne.s32.totalorder %s194, %s196
      %p203 = scmp.eq.s32.totalorder %s25, 1
      %p204 = por %p202, %p203
      %p205 = scmp.ne.s32.totalorder %s196, %s197
      %p206 = scmp.eq.s32.totalorder %s25, 0
      %p207 = por %p205, %p206
      %p208 = scmp.ne.s32.totalorder %s196, %s197
      %p209 = scmp.eq.s32.totalorder %s26, 1
      %p210 = por %p208, %p209
      %p212 = scmp.ne.s32.totalorder %s197, %s211
      %p213 = scmp.eq.s32.totalorder %s26, 0
      %p214 = por %p212, %p213
      %s216 = sadd.s32 %s215, 1
      %p219 = scmp.eq.s32.totalorder %s20, 1
      %p220 = scmp.ne.s32.totalorder %s215, %s217
      %p221 = scmp.eq.s32.totalorder %s20, 0
      %p222 = por %p220, %p221
      %p223 = scmp.ne.s32.totalorder %s215, %s217
      %p224 = scmp.eq.s32.totalorder %s25, 1
      %p225 = por %p223, %p224
      %p226 = scmp.ne.s32.totalorder %s217, %s218
      %p227 = scmp.eq.s32.totalorder %s25, 0
      %p228 = por %p226, %p227
      %p229 = scmp.ne.s32.totalorder %s217, %s218
      %p230 = scmp.eq.s32.totalorder %s26, 1
      %p231 = por %p229, %p230
      %p233 = scmp.ne.s32.totalorder %s218, %s232
      %p234 = scmp.eq.s32.totalorder %s26, 0
      %p235 = por %p233, %p234
      %s237 = sadd.s32 %s236, 1
      %p240 = scmp.eq.s32.totalorder %s20, 1
      %p241 = scmp.ne.s32.totalorder %s236, %s238
      %p242 = scmp.eq.s32.totalorder %s20, 0
      %p243 = por %p241, %p242
      %p244 = scmp.ne.s32.totalorder %s236, %s238
      %p245 = scmp.eq.s32.totalorder %s25, 1
      %p246 = por %p244, %p245
      %p247 = scmp.ne.s32.totalorder %s238, %s239
      %p248 = scmp.eq.s32.totalorder %s25, 0
      %p249 = por %p247, %p248
      %p250 = scmp.ne.s32.totalorder %s238, %s239
      %p251 = scmp.eq.s32.totalorder %s26, 1
      %p252 = por %p250, %p251
      %p254 = scmp.ne.s32.totalorder %s239, %s253
      %p255 = scmp.eq.s32.totalorder %s26, 0
      %p256 = por %p254, %p255
      %s258 = sadd.s32 %s257, 1
      %p261 = scmp.eq.s32.totalorder %s20, 1
      %p262 = scmp.ne.s32.totalorder %s257, %s259
      %p263 = scmp.eq.s32.totalorder %s20, 0
      %p264 = por %p262, %p263
      %p265 = scmp.ne.s32.totalorder %s257, %s259
      %p266 = scmp.eq.s32.totalorder %s25, 1
      %p267 = por %p265, %p266
      %p268 = scmp.ne.s32.totalorder %s259, %s260
      %p269 = scmp.eq.s32.totalorder %s25, 0
      %p270 = por %p268, %p269
      %p271 = scmp.ne.s32.totalorder %s259, %s260
      %p272 = scmp.eq.s32.totalorder %s26, 1
      %p273 = por %p271, %p272
      %p275 = scmp.ne.s32.totalorder %s260, %s274
      %p276 = scmp.eq.s32.totalorder %s26, 0
      %p277 = por %p275, %p276
      %s279 = sadd.s32 %s278, 1
      %p282 = scmp.eq.s32.totalorder %s20, 1
      %p283 = scmp.ne.s32.totalorder %s278, %s280
      %p284 = scmp.eq.s32.totalorder %s20, 0
      %p285 = por %p283, %p284
      %p286 = scmp.ne.s32.totalorder %s278, %s280
      %p287 = scmp.eq.s32.totalorder %s25, 1
      %p288 = por %p286, %p287
      %p289 = scmp.ne.s32.totalorder %s280, %s281
      %p290 = scmp.eq.s32.totalorder %s25, 0
      %p291 = por %p289, %p290
      %p292 = scmp.ne.s32.totalorder %s280, %s281
      %p293 = scmp.eq.s32.totalorder %s26, 1
      %p294 = por %p292, %p293
      %p296 = scmp.ne.s32.totalorder %s281, %s295
      %p297 = scmp.eq.s32.totalorder %s26, 0
      %p298 = por %p296, %p297
      %s299 = ssub.s32 %s27, %s46
      %s300 = ssub.s32 %s28, %s42
      %s301 = sor.u32 %s299, %s300
      %p302 = scmp.eq.s32.totalorder %s301, 0
      %s304 = sadd.s32 %s303, 1
      %s305 = scalar_select %p302, %s303, %s304
      %p308 = pneg %p302
      %p309 = scmp.eq.s32.totalorder %s20, 1
      %p310 = por %p308, %p309
      %p311 = scmp.ne.s32.totalorder %s303, %s306
      %p312 = scmp.eq.s32.totalorder %s20, 0
      %p313 = por %p311, %p312
      %p314 = scmp.ne.s32.totalorder %s303, %s306
      %p315 = scmp.eq.s32.totalorder %s25, 1
      %p316 = por %p314, %p315
      %p317 = scmp.ne.s32.totalorder %s306, %s307
      %p318 = scmp.eq.s32.totalorder %s25, 0
      %p319 = por %p317, %p318
      %p320 = scmp.ne.s32.totalorder %s306, %s307
      %p321 = scmp.eq.s32.totalorder %s26, 1
      %p322 = por %p320, %p321
      %p324 = scmp.ne.s32.totalorder %s307, %s323
      %p325 = scmp.eq.s32.totalorder %s26, 0
      %p326 = por %p324, %p325
      %p327 = scmp.le.s32.totalorder 1, %s20
      %p328 = scmp.lt.s32.totalorder %s20, 3
      %p329 = pnand %p327, %p328
      %p330 = pneg %p329
      // Predicated region
      $region9: #{tpu_custom_call.1} parent=5 // pred_check
        _
      $region10: #{tpu_custom_call.1} parent=5 // pred_check_branch
        %332 = sbr.rel (%p329) target = $region12
      $region11: #{tpu_custom_call.1} parent=5 // pred_region
        %s333 = ssub.s32 %s20, 1
        // Predicated region
        $region13: #{tpu_custom_call.1} parent=11 // pred_check
          %p334 = pneg %p144
        $region14: #{tpu_custom_call.1} parent=11 // pred_check_branch
          %336 = sbr.rel (%p334) target = $region16
        $region15: #{tpu_custom_call.1} parent=11 // pred_region
          _
        $region16: #{tpu_custom_call.1} parent=11 // pred_fallthru
          _
        // Predicated region
        $region17: #{tpu_custom_call.1} parent=11 // pred_check
          %p337 = pneg %p165
        $region18: #{tpu_custom_call.1} parent=11 // pred_check_branch
          %339 = sbr.rel (%p337) target = $region20
        $region19: #{tpu_custom_call.1} parent=11 // pred_region
          _
        $region20: #{tpu_custom_call.1} parent=11 // pred_fallthru
          _
        // Predicated region
        $region21: #{tpu_custom_call.1} parent=11 // pred_check
          %p340 = pneg %p186
        $region22: #{tpu_custom_call.1} parent=11 // pred_check_branch
          %342 = sbr.rel (%p340) target = $region24
        $region23: #{tpu_custom_call.1} parent=11 // pred_region
          _
        $region24: #{tpu_custom_call.1} parent=11 // pred_fallthru
          _
        // Predicated region
        $region25: #{tpu_custom_call.1} parent=11 // pred_check
          %p343 = pneg %p207
        $region26: #{tpu_custom_call.1} parent=11 // pred_check_branch
          %345 = sbr.rel (%p343) target = $region28
        $region27: #{tpu_custom_call.1} parent=11 // pred_region
          _
        $region28: #{tpu_custom_call.1} parent=11 // pred_fallthru
          _
        // Predicated region
        $region29: #{tpu_custom_call.1} parent=11 // pred_check
          %p346 = pneg %p228
        $region30: #{tpu_custom_call.1} parent=11 // pred_check_branch
          %348 = sbr.rel (%p346) target = $region32
        $region31: #{tpu_custom_call.1} parent=11 // pred_region
          _
        $region32: #{tpu_custom_call.1} parent=11 // pred_fallthru
          _
        // Predicated region
        $region33: #{tpu_custom_call.1} parent=11 // pred_check
          %p349 = pneg %p249
        $region34: #{tpu_custom_call.1} parent=11 // pred_check_branch
          %351 = sbr.rel (%p349) target = $region36
        $region35: #{tpu_custom_call.1} parent=11 // pred_region
          _
        $region36: #{tpu_custom_call.1} parent=11 // pred_fallthru
          _
        // Predicated region
        $region37: #{tpu_custom_call.1} parent=11 // pred_check
          %p352 = pneg %p270
        $region38: #{tpu_custom_call.1} parent=11 // pred_check_branch
          %354 = sbr.rel (%p352) target = $region40
        $region39: #{tpu_custom_call.1} parent=11 // pred_region
          _
        $region40: #{tpu_custom_call.1} parent=11 // pred_fallthru
          _
        // Predicated region
        $region41: #{tpu_custom_call.1} parent=11 // pred_check
          %p355 = pneg %p291
        $region42: #{tpu_custom_call.1} parent=11 // pred_check_branch
          %357 = sbr.rel (%p355) target = $region44
        $region43: #{tpu_custom_call.1} parent=11 // pred_region
          _
        $region44: #{tpu_custom_call.1} parent=11 // pred_fallthru
          _
      $region12: #{tpu_custom_call.1} parent=5 // pred_fallthru
        _
      %p358 = scmp.lt.s32.totalorder %s20, 2
      // Predicated region
      $region45: #{tpu_custom_call.1} parent=5 // pred_check
        %p359 = pneg %p358
      $region46: #{tpu_custom_call.1} parent=5 // pred_check_branch
        %361 = sbr.rel (%p359) target = $region48
      $region47: #{tpu_custom_call.1} parent=5 // pred_region
        // Predicated region
        $region49: #{tpu_custom_call.1} parent=47 // pred_check
          %p362 = pneg %p61
        $region50: #{tpu_custom_call.1} parent=47 // pred_check_branch
          %364 = sbr.rel (%p362) target = $region52
        $region51: #{tpu_custom_call.1} parent=47 // pred_region
          %p365 = scmp.lt.s32.totalorder %s27, 1
          %s366 = scalar_select %p365, %s27, 1
          %p367 = scmp.lt.s32.totalorder %s28, 0
          %s368 = scalar_select %p367, %s28, 0
          %s369 = sadd.s32 %s368, %s366
          %s370 = smul.addr %s369, 8
          %s371 = scalar_lea.vmem %s0, %s370
        $region52: #{tpu_custom_call.1} parent=47 // pred_fallthru
          _
        // Predicated region
        $region53: #{tpu_custom_call.1} parent=47 // pred_check
          %p372 = pneg %p89
        $region54: #{tpu_custom_call.1} parent=47 // pred_check_branch
          %374 = sbr.rel (%p372) target = $region56
        $region55: #{tpu_custom_call.1} parent=47 // pred_region
          %p375 = scmp.lt.s32.totalorder %s27, 1
          %s376 = scalar_select %p375, %s27, 1
          %p377 = scmp.lt.s32.totalorder %s29, 0
          %s378 = scalar_select %p377, %s29, 0
          %s379 = sadd.s32 %s378, %s376
          %s380 = smul.addr %s379, 8
          %s381 = scalar_lea.vmem %s1, %s380
        $region56: #{tpu_custom_call.1} parent=47 // pred_fallthru
          _
        // Predicated region
        $region57: #{tpu_custom_call.1} parent=47 // pred_check
          %p382 = pneg %p117
        $region58: #{tpu_custom_call.1} parent=47 // pred_check_branch
          %384 = sbr.rel (%p382) target = $region60
        $region59: #{tpu_custom_call.1} parent=47 // pred_region
          %p385 = scmp.lt.s32.totalorder %s27, 1
          %s386 = scalar_select %p385, %s27, 1
          %p387 = scmp.lt.s32.totalorder %s29, 0
          %s388 = scalar_select %p387, %s29, 0
          %s389 = sadd.s32 %s388, %s386
          %s390 = smul.addr %s389, 8
          %s391 = scalar_lea.vmem %s2, %s390
        $region60: #{tpu_custom_call.1} parent=47 // pred_fallthru
          _
      $region48: #{tpu_custom_call.1} parent=5 // pred_fallthru
        _
      %p392 = scmp.le.s32.totalorder 1, %s20
      %p393 = scmp.lt.s32.totalorder %s20, 3
      %p394 = pnand %p392, %p393
      %p395 = pneg %p394
      // Predicated region
      $region61: #{tpu_custom_call.1} parent=5 // pred_check
        _
      $region62: #{tpu_custom_call.1} parent=5 // pred_check_branch
        %397 = sbr.rel (%p394) target = $region64
      $region63: #{tpu_custom_call.1} parent=5 // pred_region
        %s398 = ssub.s32 %s20, 1
        %p399 = scmp.lt.s32.totalorder %s30, 1
        %s400 = scalar_select %p399, %s30, 1
        %p401 = scmp.lt.s32.totalorder %s31, 0
        %s402 = scalar_select %p401, %s31, 0
        %s403 = sadd.s32 %s402, %s400
        %s404 = smul.addr %s403, 8
        %s405 = scalar_lea.vmem %s0, %s404
        %p406 = pneg %p67
        %p407 = pneg %p64
        %p408 = scmp.lt.s32.totalorder %s30, 1
        %s409 = scalar_select %p408, %s30, 1
        %p410 = scmp.lt.s32.totalorder %s32, 0
        %s411 = scalar_select %p410, %s32, 0
        %s412 = sadd.s32 %s411, %s409
        %s413 = smul.addr %s412, 8
        %s414 = scalar_lea.vmem %s1, %s413
        %p415 = pneg %p95
        %p416 = pneg %p92
        %p417 = scmp.lt.s32.totalorder %s30, 1
        %s418 = scalar_select %p417, %s30, 1
        %p419 = scmp.lt.s32.totalorder %s32, 0
        %s420 = scalar_select %p419, %s32, 0
        %s421 = sadd.s32 %s420, %s418
        %s422 = smul.addr %s421, 8
        %s423 = scalar_lea.vmem %s2, %s422
        %p424 = pneg %p123
        %p425 = pneg %p120
        %p426 = pneg %p144
        %p427 = pneg %p141
        %p428 = pneg %p165
        %p429 = pneg %p162
        %p430 = pneg %p186
        %p431 = pneg %p183
        %p432 = pneg %p207
        %p433 = pneg %p204
        %p434 = pneg %p228
        %p435 = pneg %p225
        %p436 = pneg %p249
        %p437 = pneg %p246
        %p438 = pneg %p270
        %p439 = pneg %p267
        %p440 = pneg %p291
        %p441 = pneg %p288
        %p442 = pneg %p319
        %p443 = pneg %p316
        %s444 = sand.u32 %s306, 1
        %s445 = scalar_lea.sflag [#allocation7], %s444
        %s446 = sand.u32 %s306, 1
        %s447 = smul.addr %s446, 8
        %s448 = scalar_lea.vmem [#allocation6], %s447
        %p449 = scmp.lt.s32.totalorder %s30, 1
        %s450 = scalar_select %p449, %s30, 1
        %p451 = scmp.lt.s32.totalorder %s31, 0
        %s452 = scalar_select %p451, %s31, 0
        %s453 = sadd.s32 %s452, %s450
        %s454 = smul.addr %s453, 8
        %s455 = scalar_lea.vmem %s0, %s454
        %p456 = scmp.lt.s32.totalorder %s30, 1
        %s457 = scalar_select %p456, %s30, 1
        %p458 = scmp.lt.s32.totalorder %s32, 0
        %s459 = scalar_select %p458, %s32, 0
        %s460 = sadd.s32 %s459, %s457
        %s461 = smul.addr %s460, 8
        %s462 = scalar_lea.vmem %s1, %s461
        %p463 = scmp.lt.s32.totalorder %s30, 1
        %s464 = scalar_select %p463, %s30, 1
        %p465 = scmp.lt.s32.totalorder %s32, 0
        %s466 = scalar_select %p465, %s32, 0
        %s467 = sadd.s32 %s466, %s464
        %s468 = smul.addr %s467, 8
        %s469 = scalar_lea.vmem %s2, %s468
        %p471 = scmp.eq.s32.totalorder %s32, 0
        // Predicated region
        $region65: #{tpu_custom_call.1} parent=63 // pred_check
          %p472 = pneg %p471
        $region66: #{tpu_custom_call.1} parent=63 // pred_check_branch
          %474 = sbr.rel (%p472) target = $region68
        $region67: #{tpu_custom_call.1} parent=63 // pred_region
          %v475 = vld [vmem:[%s455] sm:$0xff]
          %v476 = vpack.c.bf16 %v475, %v475
          %v477 = vld [vmem:[%s3] sm:$0xff]
          %v478 = vld [vmem:[%s3 + $0x8] sm:$0xff]
          %v479 = vld [vmem:[%s3 + $0x10] sm:$0xff]
          %v480 = vld [vmem:[%s3 + $0x18] sm:$0xff]
          %v481 = vld [vmem:[%s3 + $0x20] sm:$0xff]
          %v482 = vld [vmem:[%s3 + $0x28] sm:$0xff]
          %v483 = vld [vmem:[%s3 + $0x30] sm:$0xff]
          %v484 = vld [vmem:[%s3 + $0x38] sm:$0xff]
          %v485 = vld [vmem:[%s3 + $0x40] sm:$0xff]
          %v486 = vld [vmem:[%s3 + $0x48] sm:$0xff]
          %v487 = vld [vmem:[%s3 + $0x50] sm:$0xff]
          %v488 = vld [vmem:[%s3 + $0x58] sm:$0xff]
          %v489 = vld [vmem:[%s3 + $0x60] sm:$0xff]
          %v490 = vld [vmem:[%s3 + $0x68] sm:$0xff]
          %v491 = vld [vmem:[%s3 + $0x70] sm:$0xff]
          %v492 = vld [vmem:[%s3 + $0x78] sm:$0xff]
          %v493 = vpack.c.bf16 %v478, %v477
          %v494 = vpack.c.bf16 %v480, %v479
          %v495 = vpack.c.bf16 %v482, %v481
          %v496 = vpack.c.bf16 %v484, %v483
          %v497 = vpack.c.bf16 %v486, %v485
          %v498 = vpack.c.bf16 %v488, %v487
          %v499 = vpack.c.bf16 %v490, %v489
          %v500 = vpack.c.bf16 %v492, %v491
          %v501 = vld [vmem:[%s7] sm:$0x1]
          %v503 = vlaneseq
          %v504 = vshrl.u32 %v503, 7
          %v505 = vsub.s32 0, %v504
          %v506 = vrot.slane %v501, %v505
          %vm508 = vcmask 261120
          %v510 = vsel %vm508, %v476, 0
          %512 = vmatprep.subr.bf16.mxu0 0
          %513 = vmatpush1.bf16.msra.mxu0 %v493
          %514 = vmatprep.subr.bf16.mxu0 0
          %515 = vmatpush1.bf16.msra.mxu0 %v494
          %516 = vmatprep.subr.bf16.mxu0 0
          %517 = vmatpush1.bf16.msra.mxu0 0
          %518 = vmatprep.subr.bf16.mxu0 0
          %519 = vmatpush1.bf16.msra.mxu0 0
          %520 = vmatprep.subr.bf16.mxu0 0
          %521 = vmatpush1.bf16.msra.mxu0 0
          %522 = vmatprep.subr.bf16.mxu0 0
          %523 = vmatpush1.bf16.msra.mxu0 0
          %524 = vmatprep.subr.bf16.mxu0 0
          %525 = vmatpush1.bf16.msra.mxu0 0
          %526 = vmatprep.subr.bf16.mxu0 0
          %527 = vmatpush1.bf16.msra.mxu0 0
          %528 = vmatprep.subr.bf16.mxu0 0
          %529 = vmatpush1.bf16.msra.mxu0 0
          %530 = vmatprep.subr.bf16.mxu0 0
          %531 = vmatpush1.bf16.msra.mxu0 0
          %532 = vmatprep.subr.bf16.mxu0 0
          %533 = vmatpush1.bf16.msra.mxu0 0
          %534 = vmatprep.subr.bf16.mxu0 0
          %535 = vmatpush1.bf16.msra.mxu0 0
          %536 = vmatprep.subr.bf16.mxu0 0
          %537 = vmatpush1.bf16.msra.mxu0 0
          %538 = vmatprep.subr.bf16.mxu0 0
          %539 = vmatpush1.bf16.msra.mxu0 0
          %540 = vmatprep.subr.bf16.mxu0 0
          %541 = vmatpush1.bf16.msra.mxu0 0
          %542 = vmatprep.subr.bf16.mxu0 0
          %543 = vmatpush1.bf16.msra.mxu0 0
          %544 = vmatprep.mubr.bf16.mxu0 0
          %545 = vmatmul.mubr.bf16.gmra.mrb[0].mxu0 %v510
          %v546 = vpop.f32.mrb[0].mxu0
          %v547 = vadd.f32 %v506, %v546
          %v548 = vpop.f32.mrb[0].mxu0
          %v549 = vpop.f32.mrb[0].mxu0
          %v550 = vpop.f32.mrb[0].mxu0
          %551 = vdwg.mxu0
          %v552 = vmul.f32 %v547, 0.35355338
          %vm553 = vcmask 64512
          %554 = vst.msk [vmem:[#allocation2] sm:$0xff] %vm553, %v552
          %s555 = scalar_lea.vmem %s7, 1
          %v556 = vld [vmem:[%s555] sm:$0x1]
          %v558 = vlaneseq
          %v559 = vshrl.u32 %v558, 7
          %v560 = vsub.s32 0, %v559
          %v561 = vrot.slane %v556, %v560
          %563 = vmatprep.subr.bf16.mxu0 0
          %564 = vmatpush1.bf16.msra.mxu0 %v495
          %565 = vmatprep.subr.bf16.mxu0 0
          %566 = vmatpush1.bf16.msra.mxu0 %v496
          %567 = vmatprep.subr.bf16.mxu0 0
          %568 = vmatpush1.bf16.msra.mxu0 0
          %569 = vmatprep.subr.bf16.mxu0 0
          %570 = vmatpush1.bf16.msra.mxu0 0
          %571 = vmatprep.subr.bf16.mxu0 0
          %572 = vmatpush1.bf16.msra.mxu0 0
          %573 = vmatprep.subr.bf16.mxu0 0
          %574 = vmatpush1.bf16.msra.mxu0 0
          %575 = vmatprep.subr.bf16.mxu0 0
          %576 = vmatpush1.bf16.msra.mxu0 0
          %577 = vmatprep.subr.bf16.mxu0 0
          %578 = vmatpush1.bf16.msra.mxu0 0
          %579 = vmatprep.subr.bf16.mxu0 0
          %580 = vmatpush1.bf16.msra.mxu0 0
          %581 = vmatprep.subr.bf16.mxu0 0
          %582 = vmatpush1.bf16.msra.mxu0 0
          %583 = vmatprep.subr.bf16.mxu0 0
          %584 = vmatpush1.bf16.msra.mxu0 0
          %585 = vmatprep.subr.bf16.mxu0 0
          %586 = vmatpush1.bf16.msra.mxu0 0
          %587 = vmatprep.subr.bf16.mxu0 0
          %588 = vmatpush1.bf16.msra.mxu0 0
          %589 = vmatprep.subr.bf16.mxu0 0
          %590 = vmatpush1.bf16.msra.mxu0 0
          %591 = vmatprep.subr.bf16.mxu0 0
          %592 = vmatpush1.bf16.msra.mxu0 0
          %593 = vmatprep.subr.bf16.mxu0 0
          %594 = vmatpush1.bf16.msra.mxu0 0
          %595 = vmatprep.mubr.bf16.mxu0 0
          %596 = vmatmul.mubr.bf16.gmra.mrb[0].mxu0 %v510
          %v597 = vpop.f32.mrb[0].mxu0
          %v598 = vadd.f32 %v561, %v597
          %v599 = vpop.f32.mrb[0].mxu0
          %v600 = vpop.f32.mrb[0].mxu0
          %v601 = vpop.f32.mrb[0].mxu0
          %602 = vdwg.mxu0
          %v603 = vmul.f32 %v598, 0.35355338
          %s604 = scalar_lea.vmem [#allocation2], 8
          %605 = vst.msk [vmem:[%s604] sm:$0xff] %vm553, %v603
          %s606 = scalar_lea.vmem %s7, 2
          %v607 = vld [vmem:[%s606] sm:$0x1]
          %v609 = vlaneseq
          %v610 = vshrl.u32 %v609, 7
          %v611 = vsub.s32 0, %v610
          %v612 = vrot.slane %v607, %v611
          %614 = vmatprep.subr.bf16.mxu0 0
          %615 = vmatpush1.bf16.msra.mxu0 %v497
          %616 = vmatprep.subr.bf16.mxu0 0
          %617 = vmatpush1.bf16.msra.mxu0 %v498
          %618 = vmatprep.subr.bf16.mxu0 0
          %619 = vmatpush1.bf16.msra.mxu0 0
          %620 = vmatprep.subr.bf16.mxu0 0
          %621 = vmatpush1.bf16.msra.mxu0 0
          %622 = vmatprep.subr.bf16.mxu0 0
          %623 = vmatpush1.bf16.msra.mxu0 0
          %624 = vmatprep.subr.bf16.mxu0 0
          %625 = vmatpush1.bf16.msra.mxu0 0
          %626 = vmatprep.subr.bf16.mxu0 0
          %627 = vmatpush1.bf16.msra.mxu0 0
          %628 = vmatprep.subr.bf16.mxu0 0
          %629 = vmatpush1.bf16.msra.mxu0 0
          %630 = vmatprep.subr.bf16.mxu0 0
          %631 = vmatpush1.bf16.msra.mxu0 0
          %632 = vmatprep.subr.bf16.mxu0 0
          %633 = vmatpush1.bf16.msra.mxu0 0
          %634 = vmatprep.subr.bf16.mxu0 0
          %635 = vmatpush1.bf16.msra.mxu0 0
          %636 = vmatprep.subr.bf16.mxu0 0
          %637 = vmatpush1.bf16.msra.mxu0 0
          %638 = vmatprep.subr.bf16.mxu0 0
          %639 = vmatpush1.bf16.msra.mxu0 0
          %640 = vmatprep.subr.bf16.mxu0 0
          %641 = vmatpush1.bf16.msra.mxu0 0
          %642 = vmatprep.subr.bf16.mxu0 0
          %643 = vmatpush1.bf16.msra.mxu0 0
          %644 = vmatprep.subr.bf16.mxu0 0
          %645 = vmatpush1.bf16.msra.mxu0 0
          %646 = vmatprep.mubr.bf16.mxu0 0
          %647 = vmatmul.mubr.bf16.gmra.mrb[0].mxu0 %v510
          %v648 = vpop.f32.mrb[0].mxu0
          %v649 = vadd.f32 %v612, %v648
          %v650 = vpop.f32.mrb[0].mxu0
          %v651 = vpop.f32.mrb[0].mxu0
          %v652 = vpop.f32.mrb[0].mxu0
          %653 = vdwg.mxu0
          %v654 = vmul.f32 %v649, 0.35355338
          %s655 = scalar_lea.vmem [#allocation2], 16
          %656 = vst.msk [vmem:[%s655] sm:$0xff] %vm553, %v654
          %s657 = scalar_lea.vmem %s7, 3
          %v658 = vld [vmem:[%s657] sm:$0x1]
          %v660 = vlaneseq
          %v661 = vshrl.u32 %v660, 7
          %v662 = vsub.s32 0, %v661
          %v663 = vrot.slane %v658, %v662
          %665 = vmatprep.subr.bf16.mxu0 0
          %666 = vmatpush1.bf16.msra.mxu0 %v499
          %667 = vmatprep.subr.bf16.mxu0 0
          %668 = vmatpush1.bf16.msra.mxu0 %v500
          %669 = vmatprep.subr.bf16.mxu0 0
          %670 = vmatpush1.bf16.msra.mxu0 0
          %671 = vmatprep.subr.bf16.mxu0 0
          %672 = vmatpush1.bf16.msra.mxu0 0
          %673 = vmatprep.subr.bf16.mxu0 0
          %674 = vmatpush1.bf16.msra.mxu0 0
          %675 = vmatprep.subr.bf16.mxu0 0
          %676 = vmatpush1.bf16.msra.mxu0 0
          %677 = vmatprep.subr.bf16.mxu0 0
          %678 = vmatpush1.bf16.msra.mxu0 0
          %679 = vmatprep.subr.bf16.mxu0 0
          %680 = vmatpush1.bf16.msra.mxu0 0
          %681 = vmatprep.subr.bf16.mxu0 0
          %682 = vmatpush1.bf16.msra.mxu0 0
          %683 = vmatprep.subr.bf16.mxu0 0
          %684 = vmatpush1.bf16.msra.mxu0 0
          %685 = vmatprep.subr.bf16.mxu0 0
          %686 = vmatpush1.bf16.msra.mxu0 0
          %687 = vmatprep.subr.bf16.mxu0 0
          %688 = vmatpush1.bf16.msra.mxu0 0
          %689 = vmatprep.subr.bf16.mxu0 0
          %690 = vmatpush1.bf16.msra.mxu0 0
          %691 = vmatprep.subr.bf16.mxu0 0
          %692 = vmatpush1.bf16.msra.mxu0 0
          %693 = vmatprep.subr.bf16.mxu0 0
          %694 = vmatpush1.bf16.msra.mxu0 0
          %695 = vmatprep.subr.bf16.mxu0 0
          %696 = vmatpush1.bf16.msra.mxu0 0
          %697 = vmatprep.mubr.bf16.mxu0 0
          %698 = vmatmul.mubr.bf16.gmra.mrb[0].mxu0 %v510
          %v699 = vpop.f32.mrb[0].mxu0
          %v700 = vadd.f32 %v663, %v699
          %v701 = vpop.f32.mrb[0].mxu0
          %v702 = vpop.f32.mrb[0].mxu0
          %v703 = vpop.f32.mrb[0].mxu0
          %704 = vdwg.mxu0
          %v705 = vmul.f32 %v700, 0.35355338
          %s706 = scalar_lea.vmem [#allocation2], 24
          %707 = vst.msk [vmem:[%s706] sm:$0xff] %vm553, %v705
          %vm708 = vcmask 7168
          %709 = vst.msk [vmem:[#allocation4] sm:$0xff] %vm708, -inf
          %710 = vst.msk [vmem:[#allocation4 + $0x8] sm:$0xff] %vm708, -inf
          %711 = vst.msk [vmem:[#allocation4 + $0x10] sm:$0xff] %vm708, -inf
          %712 = vst.msk [vmem:[#allocation4 + $0x18] sm:$0xff] %vm708, -inf
          %713 = vst.msk [vmem:[#allocation5] sm:$0xff] %vm708, 0.0
          %714 = vst.msk [vmem:[#allocation5 + $0x8] sm:$0xff] %vm708, 0.0
          %715 = vst.msk [vmem:[#allocation5 + $0x10] sm:$0xff] %vm708, 0.0
          %716 = vst.msk [vmem:[#allocation5 + $0x18] sm:$0xff] %vm708, 0.0
          %717 = vst.msk [vmem:[#allocation3] sm:$0xff] %vm553, 0.0
          %718 = vst.msk [vmem:[#allocation3 + $0x8] sm:$0xff] %vm553, 0.0
          %719 = vst.msk [vmem:[#allocation3 + $0x10] sm:$0xff] %vm553, 0.0
          %720 = vst.msk [vmem:[#allocation3 + $0x18] sm:$0xff] %vm553, 0.0
        $region68: #{tpu_custom_call.1} parent=63 // pred_fallthru
          _
        %v721 = vld [vmem:[%s462] sm:$0xff]
        %v722 = vpack.c.bf16 %v721, %v721
        %v723 = vld [vmem:[%s469] sm:$0xff]
        %v724 = vpack.c.bf16 %v723, %v723
        %v725 = vld [vmem:[%s4] sm:$0xff]
        %v726 = vld [vmem:[%s4 + $0x8] sm:$0xff]
        %v727 = vld [vmem:[%s4 + $0x10] sm:$0xff]
        %v728 = vld [vmem:[%s4 + $0x18] sm:$0xff]
        %v729 = vld [vmem:[%s4 + $0x20] sm:$0xff]
        %v730 = vld [vmem:[%s4 + $0x28] sm:$0xff]
        %v731 = vld [vmem:[%s4 + $0x30] sm:$0xff]
        %v732 = vld [vmem:[%s4 + $0x38] sm:$0xff]
        %v733 = vld [vmem:[%s4 + $0x40] sm:$0xff]
        %v734 = vld [vmem:[%s4 + $0x48] sm:$0xff]
        %v735 = vld [vmem:[%s4 + $0x50] sm:$0xff]
        %v736 = vld [vmem:[%s4 + $0x58] sm:$0xff]
        %v737 = vld [vmem:[%s4 + $0x60] sm:$0xff]
        %v738 = vld [vmem:[%s4 + $0x68] sm:$0xff]
        %v739 = vld [vmem:[%s4 + $0x70] sm:$0xff]
        %v740 = vld [vmem:[%s4 + $0x78] sm:$0xff]
        %v741 = vpack.c.bf16 %v726, %v725
        %v742 = vpack.c.bf16 %v728, %v727
        %v743 = vpack.c.bf16 %v730, %v729
        %v744 = vpack.c.bf16 %v732, %v731
        %v745 = vpack.c.bf16 %v734, %v733
        %v746 = vpack.c.bf16 %v736, %v735
        %v747 = vpack.c.bf16 %v738, %v737
        %v748 = vpack.c.bf16 %v740, %v739
        %v749 = vld [vmem:[%s5] sm:$0xff]
        %v750 = vld [vmem:[%s5 + $0x8] sm:$0xff]
        %v751 = vld [vmem:[%s5 + $0x10] sm:$0xff]
        %v752 = vld [vmem:[%s5 + $0x18] sm:$0xff]
        %v753 = vld [vmem:[%s5 + $0x20] sm:$0xff]
        %v754 = vld [vmem:[%s5 + $0x28] sm:$0xff]
        %v755 = vld [vmem:[%s5 + $0x30] sm:$0xff]
        %v756 = vld [vmem:[%s5 + $0x38] sm:$0xff]
        %v757 = vld [vmem:[%s5 + $0x40] sm:$0xff]
        %v758 = vld [vmem:[%s5 + $0x48] sm:$0xff]
        %v759 = vld [vmem:[%s5 + $0x50] sm:$0xff]
        %v760 = vld [vmem:[%s5 + $0x58] sm:$0xff]
        %v761 = vld [vmem:[%s5 + $0x60] sm:$0xff]
        %v762 = vld [vmem:[%s5 + $0x68] sm:$0xff]
        %v763 = vld [vmem:[%s5 + $0x70] sm:$0xff]
        %v764 = vld [vmem:[%s5 + $0x78] sm:$0xff]
        %v765 = vpack.c.bf16 %v750, %v749
        %v766 = vpack.c.bf16 %v752, %v751
        %v767 = vpack.c.bf16 %v754, %v753
        %v768 = vpack.c.bf16 %v756, %v755
        %v769 = vpack.c.bf16 %v758, %v757
        %v770 = vpack.c.bf16 %v760, %v759
        %v771 = vpack.c.bf16 %v762, %v761
        %v772 = vpack.c.bf16 %v764, %v763
        %v773 = vld [vmem:[%s8] sm:$0x1]
        %v775 = vlaneseq
        %v776 = vshrl.u32 %v775, 7
        %v777 = vsub.s32 0, %v776
        %v778 = vrot.slane %v773, %v777
        %vm780 = vcmask 261120
        %v782 = vsel %vm780, %v722, 0
        %784 = vmatprep.subr.bf16.mxu0 0
        %785 = vmatpush1.bf16.msra.mxu0 %v741
        %786 = vmatprep.subr.bf16.mxu0 0
        %787 = vmatpush1.bf16.msra.mxu0 %v742
        %788 = vmatprep.subr.bf16.mxu0 0
        %789 = vmatpush1.bf16.msra.mxu0 0
        %790 = vmatprep.subr.bf16.mxu0 0
        %791 = vmatpush1.bf16.msra.mxu0 0
        %792 = vmatprep.subr.bf16.mxu0 0
        %793 = vmatpush1.bf16.msra.mxu0 0
        %794 = vmatprep.subr.bf16.mxu0 0
        %795 = vmatpush1.bf16.msra.mxu0 0
        %796 = vmatprep.subr.bf16.mxu0 0
        %797 = vmatpush1.bf16.msra.mxu0 0
        %798 = vmatprep.subr.bf16.mxu0 0
        %799 = vmatpush1.bf16.msra.mxu0 0
        %800 = vmatprep.subr.bf16.mxu0 0
        %801 = vmatpush1.bf16.msra.mxu0 0
        %802 = vmatprep.subr.bf16.mxu0 0
        %803 = vmatpush1.bf16.msra.mxu0 0
        %804 = vmatprep.subr.bf16.mxu0 0
        %805 = vmatpush1.bf16.msra.mxu0 0
        %806 = vmatprep.subr.bf16.mxu0 0
        %807 = vmatpush1.bf16.msra.mxu0 0
        %808 = vmatprep.subr.bf16.mxu0 0
        %809 = vmatpush1.bf16.msra.mxu0 0
        %810 = vmatprep.subr.bf16.mxu0 0
        %811 = vmatpush1.bf16.msra.mxu0 0
        %812 = vmatprep.subr.bf16.mxu0 0
        %813 = vmatpush1.bf16.msra.mxu0 0
        %814 = vmatprep.subr.bf16.mxu0 0
        %815 = vmatpush1.bf16.msra.mxu0 0
        %816 = vmatprep.mubr.bf16.mxu0 0
        %817 = vmatmul.mubr.bf16.gmra.mrb[0].mxu0 %v782
        %v818 = vpop.f32.mrb[0].mxu0
        %v819 = vadd.f32 %v778, %v818
        %v820 = vpop.f32.mrb[0].mxu0
        %v821 = vpop.f32.mrb[0].mxu0
        %v822 = vpop.f32.mrb[0].mxu0
        %823 = vdwg.mxu0
        %v824 = vld [vmem:[%s9] sm:$0x1]
        %v826 = vlaneseq
        %v827 = vshrl.u32 %v826, 7
        %v828 = vsub.s32 0, %v827
        %v829 = vrot.slane %v824, %v828
        %v832 = vsel %vm780, %v724, 0
        %834 = vmatprep.subr.bf16.mxu0 0
        %835 = vmatpush1.bf16.msra.mxu0 %v765
        %836 = vmatprep.subr.bf16.mxu0 0
        %837 = vmatpush1.bf16.msra.mxu0 %v766
        %838 = vmatprep.subr.bf16.mxu0 0
        %839 = vmatpush1.bf16.msra.mxu0 0
        %840 = vmatprep.subr.bf16.mxu0 0
        %841 = vmatpush1.bf16.msra.mxu0 0
        %842 = vmatprep.subr.bf16.mxu0 0
        %843 = vmatpush1.bf16.msra.mxu0 0
        %844 = vmatprep.subr.bf16.mxu0 0
        %845 = vmatpush1.bf16.msra.mxu0 0
        %846 = vmatprep.subr.bf16.mxu0 0
        %847 = vmatpush1.bf16.msra.mxu0 0
        %848 = vmatprep.subr.bf16.mxu0 0
        %849 = vmatpush1.bf16.msra.mxu0 0
        %850 = vmatprep.subr.bf16.mxu0 0
        %851 = vmatpush1.bf16.msra.mxu0 0
        %852 = vmatprep.subr.bf16.mxu0 0
        %853 = vmatpush1.bf16.msra.mxu0 0
        %854 = vmatprep.subr.bf16.mxu0 0
        %855 = vmatpush1.bf16.msra.mxu0 0
        %856 = vmatprep.subr.bf16.mxu0 0
        %857 = vmatpush1.bf16.msra.mxu0 0
        %858 = vmatprep.subr.bf16.mxu0 0
        %859 = vmatpush1.bf16.msra.mxu0 0
        %860 = vmatprep.subr.bf16.mxu0 0
        %861 = vmatpush1.bf16.msra.mxu0 0
        %862 = vmatprep.subr.bf16.mxu0 0
        %863 = vmatpush1.bf16.msra.mxu0 0
        %864 = vmatprep.subr.bf16.mxu0 0
        %865 = vmatpush1.bf16.msra.mxu0 0
        %866 = vmatprep.mubr.bf16.mxu0 0
        %867 = vmatmul.mubr.bf16.gmra.mrb[0].mxu0 %v832
        %v868 = vpop.f32.mrb[0].mxu0
        %v869 = vadd.f32 %v829, %v868
        %v870 = vpop.f32.mrb[0].mxu0
        %v871 = vpop.f32.mrb[0].mxu0
        %v872 = vpop.f32.mrb[0].mxu0
        %873 = vdwg.mxu0
        %v874 = vld [vmem:[#allocation2] sm:$0xff]
        %v875 = vpack.c.bf16 %v874, %v874
        %v876 = vpack.c.bf16 %v819, %v819
        %vm877 = vcmask 64512
        %v879 = vsel %vm877, %v875, 0
        %v882 = vsel %vm877, %v876, 0
        %884 = vmatprep.subr.bf16.mxu0 0
        %885 = vmatpush1.bf16.xpose.msra.mxu0 %v882
        %886 = vmatprep.subr.bf16.mxu0 0
        %887 = vmatpush1.bf16.xpose.msra.mxu0 0
        %888 = vmatprep.subr.bf16.mxu0 0
        %889 = vmatpush1.bf16.xpose.msra.mxu0 0
        %890 = vmatprep.subr.bf16.mxu0 0
        %891 = vmatpush1.bf16.xpose.msra.mxu0 0
        %892 = vmatprep.subr.bf16.mxu0 0
        %893 = vmatpush1.bf16.xpose.msra.mxu0 0
        %894 = vmatprep.subr.bf16.mxu0 0
        %895 = vmatpush1.bf16.xpose.msra.mxu0 0
        %896 = vmatprep.subr.bf16.mxu0 0
        %897 = vmatpush1.bf16.xpose.msra.mxu0 0
        %898 = vmatprep.subr.bf16.mxu0 0
        %899 = vmatpush1.bf16.xpose.msra.mxu0 0
        %900 = vmatprep.subr.bf16.mxu0 0
        %901 = vmatpush1.bf16.xpose.msra.mxu0 0
        %902 = vmatprep.subr.bf16.mxu0 0
        %903 = vmatpush1.bf16.xpose.msra.mxu0 0
        %904 = vmatprep.subr.bf16.mxu0 0
        %905 = vmatpush1.bf16.xpose.msra.mxu0 0
        %906 = vmatprep.subr.bf16.mxu0 0
        %907 = vmatpush1.bf16.xpose.msra.mxu0 0
        %908 = vmatprep.subr.bf16.mxu0 0
        %909 = vmatpush1.bf16.xpose.msra.mxu0 0
        %910 = vmatprep.subr.bf16.mxu0 0
        %911 = vmatpush1.bf16.xpose.msra.mxu0 0
        %912 = vmatprep.subr.bf16.mxu0 0
        %913 = vmatpush1.bf16.xpose.msra.mxu0 0
        %914 = vmatprep.subr.bf16.mxu0 0
        %915 = vmatpush1.bf16.xpose.msra.mxu0 0
        %916 = vmatprep.mubr.bf16.mxu0 0
        %917 = vmatmul.mubr.bf16.gmra.mrb[0].mxu0 %v879
        %v918 = vpop.f32.mrb[0].mxu0
        %v919 = vadd.f32 0.0, %v918
        %v920 = vpop.f32.mrb[0].mxu0
        %v921 = vpop.f32.mrb[0].mxu0
        %v922 = vpop.f32.mrb[0].mxu0
        %923 = vdwg.mxu0
        %v924 = vld [vmem:[#allocation4] sm:$0xff]
        %v925 = vsel %vm877, %v919, -inf
        %926 = vmax.xlane.f32.xlu0 %v925
        %v927 = vpop.xlane.xlu0 %926
        %v928 = vmax.f32 %v924, %v927
        %v929 = vsub.f32 %v924, %v928
        %v930 = vmul.f32 %v929, 1.442695
        %v931 = vpow.pop %v930
        %933 = vset.pattern.permute.xlu0 0
        %934 = vperm.xlu0 %933, %v928
        %v935 = vpop.permute.xlu0 %934
        %v937 = vsub.f32 %v919, %v935
        %v938 = vmul.f32 %v937, 1.442695
        %v939 = vpow.pop %v938
        %v940 = vld [vmem:[#allocation5] sm:$0xff]
        %v941 = vmul.f32 %v931, %v940
        %v942 = vsel %vm877, %v939, 0.0
        %943 = vadd.xlane.f32.xlu0 %v942
        %v944 = vpop.xlane.xlu0 %943
        %v945 = vadd.f32 %v941, %v944
        %vm946 = vcmask 7168
        %947 = vst.msk [vmem:[#allocation5] sm:$0xff] %vm946, %v945
        %v948 = vld [vmem:[#allocation3] sm:$0xff]
        %950 = vset.pattern.permute.xlu0 0
        %951 = vperm.xlu0 %950, %v931
        %v952 = vpop.permute.xlu0 %951
        %v954 = vmul.f32 %v952, %v948
        %v955 = vpack.c.bf16 %v939, %v939
        %v956 = vpack.c.bf16 %v869, %v869
        %v958 = vsel %vm877, %v955, 0
        %vm960 = vcmask 1043456
        %v962 = vsel %vm960, %v956, 0
        %964 = vmatprep.subr.bf16.mxu0 0
        %965 = vmatpush1.bf16.msra.mxu0 %v962
        %966 = vmatprep.subr.bf16.mxu0 0
        %967 = vmatpush1.bf16.msra.mxu0 0
        %968 = vmatprep.subr.bf16.mxu0 0
        %969 = vmatpush1.bf16.msra.mxu0 0
        %970 = vmatprep.subr.bf16.mxu0 0
        %971 = vmatpush1.bf16.msra.mxu0 0
        %972 = vmatprep.subr.bf16.mxu0 0
        %973 = vmatpush1.bf16.msra.mxu0 0
        %974 = vmatprep.subr.bf16.mxu0 0
        %975 = vmatpush1.bf16.msra.mxu0 0
        %976 = vmatprep.subr.bf16.mxu0 0
        %977 = vmatpush1.bf16.msra.mxu0 0
        %978 = vmatprep.subr.bf16.mxu0 0
        %979 = vmatpush1.bf16.msra.mxu0 0
        %980 = vmatprep.subr.bf16.mxu0 0
        %981 = vmatpush1.bf16.msra.mxu0 0
        %982 = vmatprep.subr.bf16.mxu0 0
        %983 = vmatpush1.bf16.msra.mxu0 0
        %984 = vmatprep.subr.bf16.mxu0 0
        %985 = vmatpush1.bf16.msra.mxu0 0
        %986 = vmatprep.subr.bf16.mxu0 0
        %987 = vmatpush1.bf16.msra.mxu0 0
        %988 = vmatprep.subr.bf16.mxu0 0
        %989 = vmatpush1.bf16.msra.mxu0 0
        %990 = vmatprep.subr.bf16.mxu0 0
        %991 = vmatpush1.bf16.msra.mxu0 0
        %992 = vmatprep.subr.bf16.mxu0 0
        %993 = vmatpush1.bf16.msra.mxu0 0
        %994 = vmatprep.subr.bf16.mxu0 0
        %995 = vmatpush1.bf16.msra.mxu0 0
        %996 = vmatprep.mubr.bf16.mxu0 0
        %997 = vmatmul.mubr.bf16.gmra.mrb[0].mxu0 %v958
        %v998 = vpop.f32.mrb[0].mxu0
        %v999 = vadd.f32 0.0, %v998
        %v1000 = vpop.f32.mrb[0].mxu0
        %v1001 = vpop.f32.mrb[0].mxu0
        %v1002 = vpop.f32.mrb[0].mxu0
        %1003 = vdwg.mxu0
        %v1004 = vadd.f32 %v954, %v999
        %1005 = vst.msk [vmem:[#allocation3] sm:$0xff] %vm877, %v1004
        %1006 = vst.msk [vmem:[#allocation4] sm:$0xff] %vm946, %v928
        %s1007 = scalar_lea.vmem %s8, 1
        %v1008 = vld [vmem:[%s1007] sm:$0x1]
        %v1010 = vlaneseq
        %v1011 = vshrl.u32 %v1010, 7
        %v1012 = vsub.s32 0, %v1011
        %v1013 = vrot.slane %v1008, %v1012
        %1015 = vmatprep.subr.bf16.mxu0 0
        %1016 = vmatpush1.bf16.msra.mxu0 %v743
        %1017 = vmatprep.subr.bf16.mxu0 0
        %1018 = vmatpush1.bf16.msra.mxu0 %v744
        %1019 = vmatprep.subr.bf16.mxu0 0
        %1020 = vmatpush1.bf16.msra.mxu0 0
        %1021 = vmatprep.subr.bf16.mxu0 0
        %1022 = vmatpush1.bf16.msra.mxu0 0
        %1023 = vmatprep.subr.bf16.mxu0 0
        %1024 = vmatpush1.bf16.msra.mxu0 0
        %1025 = vmatprep.subr.bf16.mxu0 0
        %1026 = vmatpush1.bf16.msra.mxu0 0
        %1027 = vmatprep.subr.bf16.mxu0 0
        %1028 = vmatpush1.bf16.msra.mxu0 0
        %1029 = vmatprep.subr.bf16.mxu0 0
        %1030 = vmatpush1.bf16.msra.mxu0 0
        %1031 = vmatprep.subr.bf16.mxu0 0
        %1032 = vmatpush1.bf16.msra.mxu0 0
        %1033 = vmatprep.subr.bf16.mxu0 0
        %1034 = vmatpush1.bf16.msra.mxu0 0
        %1035 = vmatprep.subr.bf16.mxu0 0
        %1036 = vmatpush1.bf16.msra.mxu0 0
        %1037 = vmatprep.subr.bf16.mxu0 0
        %1038 = vmatpush1.bf16.msra.mxu0 0
        %1039 = vmatprep.subr.bf16.mxu0 0
        %1040 = vmatpush1.bf16.msra.mxu0 0
        %1041 = vmatprep.subr.bf16.mxu0 0
        %1042 = vmatpush1.bf16.msra.mxu0 0
        %1043 = vmatprep.subr.bf16.mxu0 0
        %1044 = vmatpush1.bf16.msra.mxu0 0
        %1045 = vmatprep.subr.bf16.mxu0 0
        %1046 = vmatpush1.bf16.msra.mxu0 0
        %1047 = vmatprep.mubr.bf16.mxu0 0
        %1048 = vmatmul.mubr.bf16.gmra.mrb[0].mxu0 %v782
        %v1049 = vpop.f32.mrb[0].mxu0
        %v1050 = vadd.f32 %v1013, %v1049
        %v1051 = vpop.f32.mrb[0].mxu0
        %v1052 = vpop.f32.mrb[0].mxu0
        %v1053 = vpop.f32.mrb[0].mxu0
        %1054 = vdwg.mxu0
        %s1055 = scalar_lea.vmem %s9, 1
        %v1056 = vld [vmem:[%s1055] sm:$0x1]
        %v1058 = vlaneseq
        %v1059 = vshrl.u32 %v1058, 7
        %v1060 = vsub.s32 0, %v1059
        %v1061 = vrot.slane %v1056, %v1060
        %1063 = vmatprep.subr.bf16.mxu0 0
        %1064 = vmatpush1.bf16.msra.mxu0 %v767
        %1065 = vmatprep.subr.bf16.mxu0 0
        %1066 = vmatpush1.bf16.msra.mxu0 %v768
        %1067 = vmatprep.subr.bf16.mxu0 0
        %1068 = vmatpush1.bf16.msra.mxu0 0
        %1069 = vmatprep.subr.bf16.mxu0 0
        %1070 = vmatpush1.bf16.msra.mxu0 0
        %1071 = vmatprep.subr.bf16.mxu0 0
        %1072 = vmatpush1.bf16.msra.mxu0 0
        %1073 = vmatprep.subr.bf16.mxu0 0
        %1074 = vmatpush1.bf16.msra.mxu0 0
        %1075 = vmatprep.subr.bf16.mxu0 0
        %1076 = vmatpush1.bf16.msra.mxu0 0
        %1077 = vmatprep.subr.bf16.mxu0 0
        %1078 = vmatpush1.bf16.msra.mxu0 0
        %1079 = vmatprep.subr.bf16.mxu0 0
        %1080 = vmatpush1.bf16.msra.mxu0 0
        %1081 = vmatprep.subr.bf16.mxu0 0
        %1082 = vmatpush1.bf16.msra.mxu0 0
        %1083 = vmatprep.subr.bf16.mxu0 0
        %1084 = vmatpush1.bf16.msra.mxu0 0
        %1085 = vmatprep.subr.bf16.mxu0 0
        %1086 = vmatpush1.bf16.msra.mxu0 0
        %1087 = vmatprep.subr.bf16.mxu0 0
        %1088 = vmatpush1.bf16.msra.mxu0 0
        %1089 = vmatprep.subr.bf16.mxu0 0
        %1090 = vmatpush1.bf16.msra.mxu0 0
        %1091 = vmatprep.subr.bf16.mxu0 0
        %1092 = vmatpush1.bf16.msra.mxu0 0
        %1093 = vmatprep.subr.bf16.mxu0 0
        %1094 = vmatpush1.bf16.msra.mxu0 0
        %1095 = vmatprep.mubr.bf16.mxu0 0
        %1096 = vmatmul.mubr.bf16.gmra.mrb[0].mxu0 %v832
        %v1097 = vpop.f32.mrb[0].mxu0
        %v1098 = vadd.f32 %v1061, %v1097
        %v1099 = vpop.f32.mrb[0].mxu0
        %v1100 = vpop.f32.mrb[0].mxu0
        %v1101 = vpop.f32.mrb[0].mxu0
        %1102 = vdwg.mxu0
        %s1103 = scalar_lea.vmem [#allocation2], 8
        %v1104 = vld [vmem:[%s1103] sm:$0xff]
        %v1105 = vpack.c.bf16 %v1104, %v1104
        %v1106 = vpack.c.bf16 %v1050, %v1050
        %v1108 = vsel %vm877, %v1105, 0
        %v1111 = vsel %vm877, %v1106, 0
        %1113 = vmatprep.subr.bf16.mxu0 0
        %1114 = vmatpush1.bf16.xpose.msra.mxu0 %v1111
        %1115 = vmatprep.subr.bf16.mxu0 0
        %1116 = vmatpush1.bf16.xpose.msra.mxu0 0
        %1117 = vmatprep.subr.bf16.mxu0 0
        %1118 = vmatpush1.bf16.xpose.msra.mxu0 0
        %1119 = vmatprep.subr.bf16.mxu0 0
        %1120 = vmatpush1.bf16.xpose.msra.mxu0 0
        %1121 = vmatprep.subr.bf16.mxu0 0
        %1122 = vmatpush1.bf16.xpose.msra.mxu0 0
        %1123 = vmatprep.subr.bf16.mxu0 0
        %1124 = vmatpush1.bf16.xpose.msra.mxu0 0
        %1125 = vmatprep.subr.bf16.mxu0 0
        %1126 = vmatpush1.bf16.xpose.msra.mxu0 0
        %1127 = vmatprep.subr.bf16.mxu0 0
        %1128 = vmatpush1.bf16.xpose.msra.mxu0 0
        %1129 = vmatprep.subr.bf16.mxu0 0
        %1130 = vmatpush1.bf16.xpose.msra.mxu0 0
        %1131 = vmatprep.subr.bf16.mxu0 0
        %1132 = vmatpush1.bf16.xpose.msra.mxu0 0
        %1133 = vmatprep.subr.bf16.mxu0 0
        %1134 = vmatpush1.bf16.xpose.msra.mxu0 0
        %1135 = vmatprep.subr.bf16.mxu0 0
        %1136 = vmatpush1.bf16.xpose.msra.mxu0 0
        %1137 = vmatprep.subr.bf16.mxu0 0
        %1138 = vmatpush1.bf16.xpose.msra.mxu0 0
        %1139 = vmatprep.subr.bf16.mxu0 0
        %1140 = vmatpush1.bf16.xpose.msra.mxu0 0
        %1141 = vmatprep.subr.bf16.mxu0 0
        %1142 = vmatpush1.bf16.xpose.msra.mxu0 0
        %1143 = vmatprep.subr.bf16.mxu0 0
        %1144 = vmatpush1.bf16.xpose.msra.mxu0 0
        %1145 = vmatprep.mubr.bf16.mxu0 0
        %1146 = vmatmul.mubr.bf16.gmra.mrb[0].mxu0 %v1108
        %v1147 = vpop.f32.mrb[0].mxu0
        %v1148 = vadd.f32 0.0, %v1147
        %v1149 = vpop.f32.mrb[0].mxu0
        %v1150 = vpop.f32.mrb[0].mxu0
        %v1151 = vpop.f32.mrb[0].mxu0
        %1152 = vdwg.mxu0
        %s1153 = scalar_lea.vmem [#allocation4], 8
        %v1154 = vld [vmem:[%s1153] sm:$0xff]
        %v1155 = vsel %vm877, %v1148, -inf
        %1156 = vmax.xlane.f32.xlu0 %v1155
        %v1157 = vpop.xlane.xlu0 %1156
        %v1158 = vmax.f32 %v1154, %v1157
        %v1159 = vsub.f32 %v1154, %v1158
        %v1160 = vmul.f32 %v1159, 1.442695
        %v1161 = vpow.pop %v1160
        %1163 = vset.pattern.permute.xlu0 0
        %1164 = vperm.xlu0 %1163, %v1158
        %v1165 = vpop.permute.xlu0 %1164
        %v1167 = vsub.f32 %v1148, %v1165
        %v1168 = vmul.f32 %v1167, 1.442695
        %v1169 = vpow.pop %v1168
        %s1170 = scalar_lea.vmem [#allocation5], 8
        %v1171 = vld [vmem:[%s1170] sm:$0xff]
        %v1172 = vmul.f32 %v1161, %v1171
        %v1173 = vsel %vm877, %v1169, 0.0
        %1174 = vadd.xlane.f32.xlu0 %v1173
        %v1175 = vpop.xlane.xlu0 %1174
        %v1176 = vadd.f32 %v1172, %v1175
        %1177 = vst.msk [vmem:[%s1170] sm:$0xff] %vm946, %v1176
        %s1178 = scalar_lea.vmem [#allocation3], 8
        %v1179 = vld [vmem:[%s1178] sm:$0xff]
        %1181 = vset.pattern.permute.xlu0 0
        %1182 = vperm.xlu0 %1181, %v1161
        %v1183 = vpop.permute.xlu0 %1182
        %v1185 = vmul.f32 %v1183, %v1179
        %v1186 = vpack.c.bf16 %v1169, %v1169
        %v1187 = vpack.c.bf16 %v1098, %v1098
        %v1189 = vsel %vm877, %v1186, 0
        %v1192 = vsel %vm960, %v1187, 0
        %1194 = vmatprep.subr.bf16.mxu0 0
        %1195 = vmatpush1.bf16.msra.mxu0 %v1192
        %1196 = vmatprep.subr.bf16.mxu0 0
        %1197 = vmatpush1.bf16.msra.mxu0 0
        %1198 = vmatprep.subr.bf16.mxu0 0
        %1199 = vmatpush1.bf16.msra.mxu0 0
        %1200 = vmatprep.subr.bf16.mxu0 0
        %1201 = vmatpush1.bf16.msra.mxu0 0
        %1202 = vmatprep.subr.bf16.mxu0 0
        %1203 = vmatpush1.bf16.msra.mxu0 0
        %1204 = vmatprep.subr.bf16.mxu0 0
        %1205 = vmatpush1.bf16.msra.mxu0 0
        %1206 = vmatprep.subr.bf16.mxu0 0
        %1207 = vmatpush1.bf16.msra.mxu0 0
        %1208 = vmatprep.subr.bf16.mxu0 0
        %1209 = vmatpush1.bf16.msra.mxu0 0
        %1210 = vmatprep.subr.bf16.mxu0 0
        %1211 = vmatpush1.bf16.msra.mxu0 0
        %1212 = vmatprep.subr.bf16.mxu0 0
        %1213 = vmatpush1.bf16.msra.mxu0 0
        %1214 = vmatprep.subr.bf16.mxu0 0
        %1215 = vmatpush1.bf16.msra.mxu0 0
        %1216 = vmatprep.subr.bf16.mxu0 0
        %1217 = vmatpush1.bf16.msra.mxu0 0
        %1218 = vmatprep.subr.bf16.mxu0 0
        %1219 = vmatpush1.bf16.msra.mxu0 0
        %1220 = vmatprep.subr.bf16.mxu0 0
        %1221 = vmatpush1.bf16.msra.mxu0 0
        %1222 = vmatprep.subr.bf16.mxu0 0
        %1223 = vmatpush1.bf16.msra.mxu0 0
        %1224 = vmatprep.subr.bf16.mxu0 0
        %1225 = vmatpush1.bf16.msra.mxu0 0
        %1226 = vmatprep.mubr.bf16.mxu0 0
        %1227 = vmatmul.mubr.bf16.gmra.mrb[0].mxu0 %v1189
        %v1228 = vpop.f32.mrb[0].mxu0
        %v1229 = vadd.f32 0.0, %v1228
        %v1230 = vpop.f32.mrb[0].mxu0
        %v1231 = vpop.f32.mrb[0].mxu0
        %v1232 = vpop.f32.mrb[0].mxu0
        %1233 = vdwg.mxu0
        %v1234 = vadd.f32 %v1185, %v1229
        %1235 = vst.msk [vmem:[%s1178] sm:$0xff] %vm877, %v1234
        %1236 = vst.msk [vmem:[%s1153] sm:$0xff] %vm946, %v1158
        %s1237 = scalar_lea.vmem %s8, 2
        %v1238 = vld [vmem:[%s1237] sm:$0x1]
        %v1240 = vlaneseq
        %v1241 = vshrl.u32 %v1240, 7
        %v1242 = vsub.s32 0, %v1241
        %v1243 = vrot.slane %v1238, %v1242
        %1245 = vmatprep.subr.bf16.mxu0 0
        %1246 = vmatpush1.bf16.msra.mxu0 %v745
        %1247 = vmatprep.subr.bf16.mxu0 0
        %1248 = vmatpush1.bf16.msra.mxu0 %v746
        %1249 = vmatprep.subr.bf16.mxu0 0
        %1250 = vmatpush1.bf16.msra.mxu0 0
        %1251 = vmatprep.subr.bf16.mxu0 0
        %1252 = vmatpush1.bf16.msra.mxu0 0
        %1253 = vmatprep.subr.bf16.mxu0 0
        %1254 = vmatpush1.bf16.msra.mxu0 0
        %1255 = vmatprep.subr.bf16.mxu0 0
        %1256 = vmatpush1.bf16.msra.mxu0 0
        %1257 = vmatprep.subr.bf16.mxu0 0
        %1258 = vmatpush1.bf16.msra.mxu0 0
        %1259 = vmatprep.subr.bf16.mxu0 0
        %1260 = vmatpush1.bf16.msra.mxu0 0
        %1261 = vmatprep.subr.bf16.mxu0 0
        %1262 = vmatpush1.bf16.msra.mxu0 0
        %1263 = vmatprep.subr.bf16.mxu0 0
        %1264 = vmatpush1.bf16.msra.mxu0 0
        %1265 = vmatprep.subr.bf16.mxu0 0
        %1266 = vmatpush1.bf16.msra.mxu0 0
        %1267 = vmatprep.subr.bf16.mxu0 0
        %1268 = vmatpush1.bf16.msra.mxu0 0
        %1269 = vmatprep.subr.bf16.mxu0 0
        %1270 = vmatpush1.bf16.msra.mxu0 0
        %1271 = vmatprep.subr.bf16.mxu0 0
        %1272 = vmatpush1.bf16.msra.mxu0 0
        %1273 = vmatprep.subr.bf16.mxu0 0
        %1274 = vmatpush1.bf16.msra.mxu0 0
        %1275 = vmatprep.subr.bf16.mxu0 0
        %1276 = vmatpush1.bf16.msra.mxu0 0
        %1277 = vmatprep.mubr.bf16.mxu0 0
        %1278 = vmatmul.mubr.bf16.gmra.mrb[0].mxu0 %v782
        %v1279 = vpop.f32.mrb[0].mxu0
        %v1280 = vadd.f32 %v1243, %v1279
        %v1281 = vpop.f32.mrb[0].mxu0
        %v1282 = vpop.f32.mrb[0].mxu0
        %v1283 = vpop.f32.mrb[0].mxu0
        %1284 = vdwg.mxu0
        %s1285 = scalar_lea.vmem %s9, 2
        %v1286 = vld [vmem:[%s1285] sm:$0x1]
        %v1288 = vlaneseq
        %v1289 = vshrl.u32 %v1288, 7
        %v1290 = vsub.s32 0, %v1289
        %v1291 = vrot.slane %v1286, %v1290
        %1293 = vmatprep.subr.bf16.mxu0 0
        %1294 = vmatpush1.bf16.msra.mxu0 %v769
        %1295 = vmatprep.subr.bf16.mxu0 0
        %1296 = vmatpush1.bf16.msra.mxu0 %v770
        %1297 = vmatprep.subr.bf16.mxu0 0
        %1298 = vmatpush1.bf16.msra.mxu0 0
        %1299 = vmatprep.subr.bf16.mxu0 0
        %1300 = vmatpush1.bf16.msra.mxu0 0
        %1301 = vmatprep.subr.bf16.mxu0 0
        %1302 = vmatpush1.bf16.msra.mxu0 0
        %1303 = vmatprep.subr.bf16.mxu0 0
        %1304 = vmatpush1.bf16.msra.mxu0 0
        %1305 = vmatprep.subr.bf16.mxu0 0
        %1306 = vmatpush1.bf16.msra.mxu0 0
        %1307 = vmatprep.subr.bf16.mxu0 0
        %1308 = vmatpush1.bf16.msra.mxu0 0
        %1309 = vmatprep.subr.bf16.mxu0 0
        %1310 = vmatpush1.bf16.msra.mxu0 0
        %1311 = vmatprep.subr.bf16.mxu0 0
        %1312 = vmatpush1.bf16.msra.mxu0 0
        %1313 = vmatprep.subr.bf16.mxu0 0
        %1314 = vmatpush1.bf16.msra.mxu0 0
        %1315 = vmatprep.subr.bf16.mxu0 0
        %1316 = vmatpush1.bf16.msra.mxu0 0
        %1317 = vmatprep.subr.bf16.mxu0 0
        %1318 = vmatpush1.bf16.msra.mxu0 0
        %1319 = vmatprep.subr.bf16.mxu0 0
        %1320 = vmatpush1.bf16.msra.mxu0 0
        %1321 = vmatprep.subr.bf16.mxu0 0
        %1322 = vmatpush1.bf16.msra.mxu0 0
        %1323 = vmatprep.subr.bf16.mxu0 0
        %1324 = vmatpush1.bf16.msra.mxu0 0
        %1325 = vmatprep.mubr.bf16.mxu0 0
        %1326 = vmatmul.mubr.bf16.gmra.mrb[0].mxu0 %v832
        %v1327 = vpop.f32.mrb[0].mxu0
        %v1328 = vadd.f32 %v1291, %v1327
        %v1329 = vpop.f32.mrb[0].mxu0
        %v1330 = vpop.f32.mrb[0].mxu0
        %v1331 = vpop.f32.mrb[0].mxu0
        %1332 = vdwg.mxu0
        %s1333 = scalar_lea.vmem [#allocation2], 16
        %v1334 = vld [vmem:[%s1333] sm:$0xff]
        %v1335 = vpack.c.bf16 %v1334, %v1334
        %v1336 = vpack.c.bf16 %v1280, %v1280
        %v1338 = vsel %vm877, %v1335, 0
        %v1341 = vsel %vm877, %v1336, 0
        %1343 = vmatprep.subr.bf16.mxu0 0
        %1344 = vmatpush1.bf16.xpose.msra.mxu0 %v1341
        %1345 = vmatprep.subr.bf16.mxu0 0
        %1346 = vmatpush1.bf16.xpose.msra.mxu0 0
        %1347 = vmatprep.subr.bf16.mxu0 0
        %1348 = vmatpush1.bf16.xpose.msra.mxu0 0
        %1349 = vmatprep.subr.bf16.mxu0 0
        %1350 = vmatpush1.bf16.xpose.msra.mxu0 0
        %1351 = vmatprep.subr.bf16.mxu0 0
        %1352 = vmatpush1.bf16.xpose.msra.mxu0 0
        %1353 = vmatprep.subr.bf16.mxu0 0
        %1354 = vmatpush1.bf16.xpose.msra.mxu0 0
        %1355 = vmatprep.subr.bf16.mxu0 0
        %1356 = vmatpush1.bf16.xpose.msra.mxu0 0
        %1357 = vmatprep.subr.bf16.mxu0 0
        %1358 = vmatpush1.bf16.xpose.msra.mxu0 0
        %1359 = vmatprep.subr.bf16.mxu0 0
        %1360 = vmatpush1.bf16.xpose.msra.mxu0 0
        %1361 = vmatprep.subr.bf16.mxu0 0
        %1362 = vmatpush1.bf16.xpose.msra.mxu0 0
        %1363 = vmatprep.subr.bf16.mxu0 0
        %1364 = vmatpush1.bf16.xpose.msra.mxu0 0
        %1365 = vmatprep.subr.bf16.mxu0 0
        %1366 = vmatpush1.bf16.xpose.msra.mxu0 0
        %1367 = vmatprep.subr.bf16.mxu0 0
        %1368 = vmatpush1.bf16.xpose.msra.mxu0 0
        %1369 = vmatprep.subr.bf16.mxu0 0
        %1370 = vmatpush1.bf16.xpose.msra.mxu0 0
        %1371 = vmatprep.subr.bf16.mxu0 0
        %1372 = vmatpush1.bf16.xpose.msra.mxu0 0
        %1373 = vmatprep.subr.bf16.mxu0 0
        %1374 = vmatpush1.bf16.xpose.msra.mxu0 0
        %1375 = vmatprep.mubr.bf16.mxu0 0
        %1376 = vmatmul.mubr.bf16.gmra.mrb[0].mxu0 %v1338
        %v1377 = vpop.f32.mrb[0].mxu0
        %v1378 = vadd.f32 0.0, %v1377
        %v1379 = vpop.f32.mrb[0].mxu0
        %v1380 = vpop.f32.mrb[0].mxu0
        %v1381 = vpop.f32.mrb[0].mxu0
        %1382 = vdwg.mxu0
        %s1383 = scalar_lea.vmem [#allocation4], 16
        %v1384 = vld [vmem:[%s1383] sm:$0xff]
        %v1385 = vsel %vm877, %v1378, -inf
        %1386 = vmax.xlane.f32.xlu0 %v1385
        %v1387 = vpop.xlane.xlu0 %1386
        %v1388 = vmax.f32 %v1384, %v1387
        %v1389 = vsub.f32 %v1384, %v1388
        %v1390 = vmul.f32 %v1389, 1.442695
        %v1391 = vpow.pop %v1390
        %1393 = vset.pattern.permute.xlu0 0
        %1394 = vperm.xlu0 %1393, %v1388
        %v1395 = vpop.permute.xlu0 %1394
        %v1397 = vsub.f32 %v1378, %v1395
        %v1398 = vmul.f32 %v1397, 1.442695
        %v1399 = vpow.pop %v1398
        %s1400 = scalar_lea.vmem [#allocation5], 16
        %v1401 = vld [vmem:[%s1400] sm:$0xff]
        %v1402 = vmul.f32 %v1391, %v1401
        %v1403 = vsel %vm877, %v1399, 0.0
        %1404 = vadd.xlane.f32.xlu0 %v1403
        %v1405 = vpop.xlane.xlu0 %1404
        %v1406 = vadd.f32 %v1402, %v1405
        %1407 = vst.msk [vmem:[%s1400] sm:$0xff] %vm946, %v1406
        %s1408 = scalar_lea.vmem [#allocation3], 16
        %v1409 = vld [vmem:[%s1408] sm:$0xff]
        %1411 = vset.pattern.permute.xlu0 0
        %1412 = vperm.xlu0 %1411, %v1391
        %v1413 = vpop.permute.xlu0 %1412
        %v1415 = vmul.f32 %v1413, %v1409
        %v1416 = vpack.c.bf16 %v1399, %v1399
        %v1417 = vpack.c.bf16 %v1328, %v1328
        %v1419 = vsel %vm877, %v1416, 0
        %v1422 = vsel %vm960, %v1417, 0
        %1424 = vmatprep.subr.bf16.mxu0 0
        %1425 = vmatpush1.bf16.msra.mxu0 %v1422
        %1426 = vmatprep.subr.bf16.mxu0 0
        %1427 = vmatpush1.bf16.msra.mxu0 0
        %1428 = vmatprep.subr.bf16.mxu0 0
        %1429 = vmatpush1.bf16.msra.mxu0 0
        %1430 = vmatprep.subr.bf16.mxu0 0
        %1431 = vmatpush1.bf16.msra.mxu0 0
        %1432 = vmatprep.subr.bf16.mxu0 0
        %1433 = vmatpush1.bf16.msra.mxu0 0
        %1434 = vmatprep.subr.bf16.mxu0 0
        %1435 = vmatpush1.bf16.msra.mxu0 0
        %1436 = vmatprep.subr.bf16.mxu0 0
        %1437 = vmatpush1.bf16.msra.mxu0 0
        %1438 = vmatprep.subr.bf16.mxu0 0
        %1439 = vmatpush1.bf16.msra.mxu0 0
        %1440 = vmatprep.subr.bf16.mxu0 0
        %1441 = vmatpush1.bf16.msra.mxu0 0
        %1442 = vmatprep.subr.bf16.mxu0 0
        %1443 = vmatpush1.bf16.msra.mxu0 0
        %1444 = vmatprep.subr.bf16.mxu0 0
        %1445 = vmatpush1.bf16.msra.mxu0 0
        %1446 = vmatprep.subr.bf16.mxu0 0
        %1447 = vmatpush1.bf16.msra.mxu0 0
        %1448 = vmatprep.subr.bf16.mxu0 0
        %1449 = vmatpush1.bf16.msra.mxu0 0
        %1450 = vmatprep.subr.bf16.mxu0 0
        %1451 = vmatpush1.bf16.msra.mxu0 0
        %1452 = vmatprep.subr.bf16.mxu0 0
        %1453 = vmatpush1.bf16.msra.mxu0 0
        %1454 = vmatprep.subr.bf16.mxu0 0
        %1455 = vmatpush1.bf16.msra.mxu0 0
        %1456 = vmatprep.mubr.bf16.mxu0 0
        %1457 = vmatmul.mubr.bf16.gmra.mrb[0].mxu0 %v1419
        %v1458 = vpop.f32.mrb[0].mxu0
        %v1459 = vadd.f32 0.0, %v1458
        %v1460 = vpop.f32.mrb[0].mxu0
        %v1461 = vpop.f32.mrb[0].mxu0
        %v1462 = vpop.f32.mrb[0].mxu0
        %1463 = vdwg.mxu0
        %v1464 = vadd.f32 %v1415, %v1459
        %1465 = vst.msk [vmem:[%s1408] sm:$0xff] %vm877, %v1464
        %1466 = vst.msk [vmem:[%s1383] sm:$0xff] %vm946, %v1388
        %s1467 = scalar_lea.vmem %s8, 3
        %v1468 = vld [vmem:[%s1467] sm:$0x1]
        %v1470 = vlaneseq
        %v1471 = vshrl.u32 %v1470, 7
        %v1472 = vsub.s32 0, %v1471
        %v1473 = vrot.slane %v1468, %v1472
        %1475 = vmatprep.subr.bf16.mxu0 0
        %1476 = vmatpush1.bf16.msra.mxu0 %v747
        %1477 = vmatprep.subr.bf16.mxu0 0
        %1478 = vmatpush1.bf16.msra.mxu0 %v748
        %1479 = vmatprep.subr.bf16.mxu0 0
        %1480 = vmatpush1.bf16.msra.mxu0 0
        %1481 = vmatprep.subr.bf16.mxu0 0
        %1482 = vmatpush1.bf16.msra.mxu0 0
        %1483 = vmatprep.subr.bf16.mxu0 0
        %1484 = vmatpush1.bf16.msra.mxu0 0
        %1485 = vmatprep.subr.bf16.mxu0 0
        %1486 = vmatpush1.bf16.msra.mxu0 0
        %1487 = vmatprep.subr.bf16.mxu0 0
        %1488 = vmatpush1.bf16.msra.mxu0 0
        %1489 = vmatprep.subr.bf16.mxu0 0
        %1490 = vmatpush1.bf16.msra.mxu0 0
        %1491 = vmatprep.subr.bf16.mxu0 0
        %1492 = vmatpush1.bf16.msra.mxu0 0
        %1493 = vmatprep.subr.bf16.mxu0 0
        %1494 = vmatpush1.bf16.msra.mxu0 0
        %1495 = vmatprep.subr.bf16.mxu0 0
        %1496 = vmatpush1.bf16.msra.mxu0 0
        %1497 = vmatprep.subr.bf16.mxu0 0
        %1498 = vmatpush1.bf16.msra.mxu0 0
        %1499 = vmatprep.subr.bf16.mxu0 0
        %1500 = vmatpush1.bf16.msra.mxu0 0
        %1501 = vmatprep.subr.bf16.mxu0 0
        %1502 = vmatpush1.bf16.msra.mxu0 0
        %1503 = vmatprep.subr.bf16.mxu0 0
        %1504 = vmatpush1.bf16.msra.mxu0 0
        %1505 = vmatprep.subr.bf16.mxu0 0
        %1506 = vmatpush1.bf16.msra.mxu0 0
        %1507 = vmatprep.mubr.bf16.mxu0 0
        %1508 = vmatmul.mubr.bf16.gmra.mrb[0].mxu0 %v782
        %v1509 = vpop.f32.mrb[0].mxu0
        %v1510 = vadd.f32 %v1473, %v1509
        %v1511 = vpop.f32.mrb[0].mxu0
        %v1512 = vpop.f32.mrb[0].mxu0
        %v1513 = vpop.f32.mrb[0].mxu0
        %1514 = vdwg.mxu0
        %s1515 = scalar_lea.vmem %s9, 3
        %v1516 = vld [vmem:[%s1515] sm:$0x1]
        %v1518 = vlaneseq
        %v1519 = vshrl.u32 %v1518, 7
        %v1520 = vsub.s32 0, %v1519
        %v1521 = vrot.slane %v1516, %v1520
        %1523 = vmatprep.subr.bf16.mxu0 0
        %1524 = vmatpush1.bf16.msra.mxu0 %v771
        %1525 = vmatprep.subr.bf16.mxu0 0
        %1526 = vmatpush1.bf16.msra.mxu0 %v772
        %1527 = vmatprep.subr.bf16.mxu0 0
        %1528 = vmatpush1.bf16.msra.mxu0 0
        %1529 = vmatprep.subr.bf16.mxu0 0
        %1530 = vmatpush1.bf16.msra.mxu0 0
        %1531 = vmatprep.subr.bf16.mxu0 0
        %1532 = vmatpush1.bf16.msra.mxu0 0
        %1533 = vmatprep.subr.bf16.mxu0 0
        %1534 = vmatpush1.bf16.msra.mxu0 0
        %1535 = vmatprep.subr.bf16.mxu0 0
        %1536 = vmatpush1.bf16.msra.mxu0 0
        %1537 = vmatprep.subr.bf16.mxu0 0
        %1538 = vmatpush1.bf16.msra.mxu0 0
        %1539 = vmatprep.subr.bf16.mxu0 0
        %1540 = vmatpush1.bf16.msra.mxu0 0
        %1541 = vmatprep.subr.bf16.mxu0 0
        %1542 = vmatpush1.bf16.msra.mxu0 0
        %1543 = vmatprep.subr.bf16.mxu0 0
        %1544 = vmatpush1.bf16.msra.mxu0 0
        %1545 = vmatprep.subr.bf16.mxu0 0
        %1546 = vmatpush1.bf16.msra.mxu0 0
        %1547 = vmatprep.subr.bf16.mxu0 0
        %1548 = vmatpush1.bf16.msra.mxu0 0
        %1549 = vmatprep.subr.bf16.mxu0 0
        %1550 = vmatpush1.bf16.msra.mxu0 0
        %1551 = vmatprep.subr.bf16.mxu0 0
        %1552 = vmatpush1.bf16.msra.mxu0 0
        %1553 = vmatprep.subr.bf16.mxu0 0
        %1554 = vmatpush1.bf16.msra.mxu0 0
        %1555 = vmatprep.mubr.bf16.mxu0 0
        %1556 = vmatmul.mubr.bf16.gmra.mrb[0].mxu0 %v832
        %v1557 = vpop.f32.mrb[0].mxu0
        %v1558 = vadd.f32 %v1521, %v1557
        %v1559 = vpop.f32.mrb[0].mxu0
        %v1560 = vpop.f32.mrb[0].mxu0
        %v1561 = vpop.f32.mrb[0].mxu0
        %1562 = vdwg.mxu0
        %s1563 = scalar_lea.vmem [#allocation2], 24
        %v1564 = vld [vmem:[%s1563] sm:$0xff]
        %v1565 = vpack.c.bf16 %v1564, %v1564
        %v1566 = vpack.c.bf16 %v1510, %v1510
        %v1568 = vsel %vm877, %v1565, 0
        %v1571 = vsel %vm877, %v1566, 0
        %1573 = vmatprep.subr.bf16.mxu0 0
        %1574 = vmatpush1.bf16.xpose.msra.mxu0 %v1571
        %1575 = vmatprep.subr.bf16.mxu0 0
        %1576 = vmatpush1.bf16.xpose.msra.mxu0 0
        %1577 = vmatprep.subr.bf16.mxu0 0
        %1578 = vmatpush1.bf16.xpose.msra.mxu0 0
        %1579 = vmatprep.subr.bf16.mxu0 0
        %1580 = vmatpush1.bf16.xpose.msra.mxu0 0
        %1581 = vmatprep.subr.bf16.mxu0 0
        %1582 = vmatpush1.bf16.xpose.msra.mxu0 0
        %1583 = vmatprep.subr.bf16.mxu0 0
        %1584 = vmatpush1.bf16.xpose.msra.mxu0 0
        %1585 = vmatprep.subr.bf16.mxu0 0
        %1586 = vmatpush1.bf16.xpose.msra.mxu0 0
        %1587 = vmatprep.subr.bf16.mxu0 0
        %1588 = vmatpush1.bf16.xpose.msra.mxu0 0
        %1589 = vmatprep.subr.bf16.mxu0 0
        %1590 = vmatpush1.bf16.xpose.msra.mxu0 0
        %1591 = vmatprep.subr.bf16.mxu0 0
        %1592 = vmatpush1.bf16.xpose.msra.mxu0 0
        %1593 = vmatprep.subr.bf16.mxu0 0
        %1594 = vmatpush1.bf16.xpose.msra.mxu0 0
        %1595 = vmatprep.subr.bf16.mxu0 0
        %1596 = vmatpush1.bf16.xpose.msra.mxu0 0
        %1597 = vmatprep.subr.bf16.mxu0 0
        %1598 = vmatpush1.bf16.xpose.msra.mxu0 0
        %1599 = vmatprep.subr.bf16.mxu0 0
        %1600 = vmatpush1.bf16.xpose.msra.mxu0 0
        %1601 = vmatprep.subr.bf16.mxu0 0
        %1602 = vmatpush1.bf16.xpose.msra.mxu0 0
        %1603 = vmatprep.subr.bf16.mxu0 0
        %1604 = vmatpush1.bf16.xpose.msra.mxu0 0
        %1605 = vmatprep.mubr.bf16.mxu0 0
        %1606 = vmatmul.mubr.bf16.gmra.mrb[0].mxu0 %v1568
        %v1607 = vpop.f32.mrb[0].mxu0
        %v1608 = vadd.f32 0.0, %v1607
        %v1609 = vpop.f32.mrb[0].mxu0
        %v1610 = vpop.f32.mrb[0].mxu0
        %v1611 = vpop.f32.mrb[0].mxu0
        %1612 = vdwg.mxu0
        %s1613 = scalar_lea.vmem [#allocation4], 24
        %v1614 = vld [vmem:[%s1613] sm:$0xff]
        %v1615 = vsel %vm877, %v1608, -inf
        %1616 = vmax.xlane.f32.xlu0 %v1615
        %v1617 = vpop.xlane.xlu0 %1616
        %v1618 = vmax.f32 %v1614, %v1617
        %v1619 = vsub.f32 %v1614, %v1618
        %v1620 = vmul.f32 %v1619, 1.442695
        %v1621 = vpow.pop %v1620
        %1623 = vset.pattern.permute.xlu0 0
        %1624 = vperm.xlu0 %1623, %v1618
        %v1625 = vpop.permute.xlu0 %1624
        %v1627 = vsub.f32 %v1608, %v1625
        %v1628 = vmul.f32 %v1627, 1.442695
        %v1629 = vpow.pop %v1628
        %s1630 = scalar_lea.vmem [#allocation5], 24
        %v1631 = vld [vmem:[%s1630] sm:$0xff]
        %v1632 = vmul.f32 %v1621, %v1631
        %v1633 = vsel %vm877, %v1629, 0.0
        %1634 = vadd.xlane.f32.xlu0 %v1633
        %v1635 = vpop.xlane.xlu0 %1634
        %v1636 = vadd.f32 %v1632, %v1635
        %1637 = vst.msk [vmem:[%s1630] sm:$0xff] %vm946, %v1636
        %s1638 = scalar_lea.vmem [#allocation3], 24
        %v1639 = vld [vmem:[%s1638] sm:$0xff]
        %1641 = vset.pattern.permute.xlu0 0
        %1642 = vperm.xlu0 %1641, %v1621
        %v1643 = vpop.permute.xlu0 %1642
        %v1645 = vmul.f32 %v1643, %v1639
        %v1646 = vpack.c.bf16 %v1629, %v1629
        %v1647 = vpack.c.bf16 %v1558, %v1558
        %v1649 = vsel %vm877, %v1646, 0
        %v1652 = vsel %vm960, %v1647, 0
        %1654 = vmatprep.subr.bf16.mxu0 0
        %1655 = vmatpush1.bf16.msra.mxu0 %v1652
        %1656 = vmatprep.subr.bf16.mxu0 0
        %1657 = vmatpush1.bf16.msra.mxu0 0
        %1658 = vmatprep.subr.bf16.mxu0 0
        %1659 = vmatpush1.bf16.msra.mxu0 0
        %1660 = vmatprep.subr.bf16.mxu0 0
        %1661 = vmatpush1.bf16.msra.mxu0 0
        %1662 = vmatprep.subr.bf16.mxu0 0
        %1663 = vmatpush1.bf16.msra.mxu0 0
        %1664 = vmatprep.subr.bf16.mxu0 0
        %1665 = vmatpush1.bf16.msra.mxu0 0
        %1666 = vmatprep.subr.bf16.mxu0 0
        %1667 = vmatpush1.bf16.msra.mxu0 0
        %1668 = vmatprep.subr.bf16.mxu0 0
        %1669 = vmatpush1.bf16.msra.mxu0 0
        %1670 = vmatprep.subr.bf16.mxu0 0
        %1671 = vmatpush1.bf16.msra.mxu0 0
        %1672 = vmatprep.subr.bf16.mxu0 0
        %1673 = vmatpush1.bf16.msra.mxu0 0
        %1674 = vmatprep.subr.bf16.mxu0 0
        %1675 = vmatpush1.bf16.msra.mxu0 0
        %1676 = vmatprep.subr.bf16.mxu0 0
        %1677 = vmatpush1.bf16.msra.mxu0 0
        %1678 = vmatprep.subr.bf16.mxu0 0
        %1679 = vmatpush1.bf16.msra.mxu0 0
        %1680 = vmatprep.subr.bf16.mxu0 0
        %1681 = vmatpush1.bf16.msra.mxu0 0
        %1682 = vmatprep.subr.bf16.mxu0 0
        %1683 = vmatpush1.bf16.msra.mxu0 0
        %1684 = vmatprep.subr.bf16.mxu0 0
        %1685 = vmatpush1.bf16.msra.mxu0 0
        %1686 = vmatprep.mubr.bf16.mxu0 0
        %1687 = vmatmul.mubr.bf16.gmra.mrb[0].mxu0 %v1649
        %v1688 = vpop.f32.mrb[0].mxu0
        %v1689 = vadd.f32 0.0, %v1688
        %v1690 = vpop.f32.mrb[0].mxu0
        %v1691 = vpop.f32.mrb[0].mxu0
        %v1692 = vpop.f32.mrb[0].mxu0
        %1693 = vdwg.mxu0
        %v1694 = vadd.f32 %v1645, %v1689
        %1695 = vst.msk [vmem:[%s1638] sm:$0xff] %vm877, %v1694
        %1696 = vst.msk [vmem:[%s1613] sm:$0xff] %vm946, %v1618
        // Predicated region
        $region69: #{tpu_custom_call.1} parent=63 // pred_check
          %p1697 = pneg %p471
        $region70: #{tpu_custom_call.1} parent=63 // pred_check_branch
          %1699 = sbr.rel (%p1697) target = $region72
        $region71: #{tpu_custom_call.1} parent=63 // pred_region
          %v1700 = vld [vmem:[%s6] sm:$0xff]
          %v1701 = vld [vmem:[%s6 + $0x8] sm:$0xff]
          %v1702 = vld [vmem:[%s6 + $0x10] sm:$0xff]
          %v1703 = vld [vmem:[%s6 + $0x18] sm:$0xff]
          %v1704 = vpack.c.bf16 %v1700, %v1700
          %v1705 = vpack.c.bf16 %v1701, %v1701
          %v1706 = vpack.c.bf16 %v1702, %v1702
          %v1707 = vpack.c.bf16 %v1703, %v1703
          %v1708 = vld [vmem:[#allocation5] sm:$0xff]
          %v1709 = vrcp.pop %v1708
          %v1710 = vld [vmem:[#allocation3] sm:$0xff]
          %1712 = vset.pattern.permute.xlu0 0
          %1713 = vperm.xlu0 %1712, %v1709
          %v1714 = vpop.permute.xlu0 %1713
          %v1716 = vmul.f32 %v1710, %v1714
          %v1717 = vpack.c.bf16 %v1716, %v1716
          %v1718 = vld [vmem:[%s1170] sm:$0xff]
          %v1719 = vrcp.pop %v1718
          %v1720 = vld [vmem:[%s1178] sm:$0xff]
          %1722 = vset.pattern.permute.xlu0 0
          %1723 = vperm.xlu0 %1722, %v1719
          %v1724 = vpop.permute.xlu0 %1723
          %v1726 = vmul.f32 %v1720, %v1724
          %v1727 = vpack.c.bf16 %v1726, %v1726
          %v1729 = vsel %vm877, %v1727, 0
          %v1732 = vsel %vm960, %v1705, 0
          %1734 = vmatprep.subr.bf16.mxu0 0
          %1735 = vmatpush1.bf16.msra.mxu0 %v1732
          %1736 = vmatprep.subr.bf16.mxu0 0
          %1737 = vmatpush1.bf16.msra.mxu0 0
          %1738 = vmatprep.subr.bf16.mxu0 0
          %1739 = vmatpush1.bf16.msra.mxu0 0
          %1740 = vmatprep.subr.bf16.mxu0 0
          %1741 = vmatpush1.bf16.msra.mxu0 0
          %1742 = vmatprep.subr.bf16.mxu0 0
          %1743 = vmatpush1.bf16.msra.mxu0 0
          %1744 = vmatprep.subr.bf16.mxu0 0
          %1745 = vmatpush1.bf16.msra.mxu0 0
          %1746 = vmatprep.subr.bf16.mxu0 0
          %1747 = vmatpush1.bf16.msra.mxu0 0
          %1748 = vmatprep.subr.bf16.mxu0 0
          %1749 = vmatpush1.bf16.msra.mxu0 0
          %1750 = vmatprep.subr.bf16.mxu0 0
          %1751 = vmatpush1.bf16.msra.mxu0 0
          %1752 = vmatprep.subr.bf16.mxu0 0
          %1753 = vmatpush1.bf16.msra.mxu0 0
          %1754 = vmatprep.subr.bf16.mxu0 0
          %1755 = vmatpush1.bf16.msra.mxu0 0
          %1756 = vmatprep.subr.bf16.mxu0 0
          %1757 = vmatpush1.bf16.msra.mxu0 0
          %1758 = vmatprep.subr.bf16.mxu0 0
          %1759 = vmatpush1.bf16.msra.mxu0 0
          %1760 = vmatprep.subr.bf16.mxu0 0
          %1761 = vmatpush1.bf16.msra.mxu0 0
          %1762 = vmatprep.subr.bf16.mxu0 0
          %1763 = vmatpush1.bf16.msra.mxu0 0
          %1764 = vmatprep.subr.bf16.mxu0 0
          %1765 = vmatpush1.bf16.msra.mxu0 0
          %1766 = vmatprep.mubr.bf16.mxu0 0
          %1767 = vmatmul.mubr.bf16.gmra.mrb[0].mxu0 %v1729
          %v1768 = vpop.f32.mrb[0].mxu0
          %v1769 = vadd.f32 0.0, %v1768
          %v1770 = vpop.f32.mrb[0].mxu0
          %v1771 = vpop.f32.mrb[0].mxu0
          %v1772 = vpop.f32.mrb[0].mxu0
          %1773 = vdwg.mxu0
          %v1775 = vsel %vm877, %v1717, 0
          %v1778 = vsel %vm960, %v1704, 0
          %1780 = vmatprep.subr.bf16.mxu0 0
          %1781 = vmatpush1.bf16.msra.mxu0 %v1778
          %1782 = vmatprep.subr.bf16.mxu0 0
          %1783 = vmatpush1.bf16.msra.mxu0 0
          %1784 = vmatprep.subr.bf16.mxu0 0
          %1785 = vmatpush1.bf16.msra.mxu0 0
          %1786 = vmatprep.subr.bf16.mxu0 0
          %1787 = vmatpush1.bf16.msra.mxu0 0
          %1788 = vmatprep.subr.bf16.mxu0 0
          %1789 = vmatpush1.bf16.msra.mxu0 0
          %1790 = vmatprep.subr.bf16.mxu0 0
          %1791 = vmatpush1.bf16.msra.mxu0 0
          %1792 = vmatprep.subr.bf16.mxu0 0
          %1793 = vmatpush1.bf16.msra.mxu0 0
          %1794 = vmatprep.subr.bf16.mxu0 0
          %1795 = vmatpush1.bf16.msra.mxu0 0
          %1796 = vmatprep.subr.bf16.mxu0 0
          %1797 = vmatpush1.bf16.msra.mxu0 0
          %1798 = vmatprep.subr.bf16.mxu0 0
          %1799 = vmatpush1.bf16.msra.mxu0 0
          %1800 = vmatprep.subr.bf16.mxu0 0
          %1801 = vmatpush1.bf16.msra.mxu0 0
          %1802 = vmatprep.subr.bf16.mxu0 0
          %1803 = vmatpush1.bf16.msra.mxu0 0
          %1804 = vmatprep.subr.bf16.mxu0 0
          %1805 = vmatpush1.bf16.msra.mxu0 0
          %1806 = vmatprep.subr.bf16.mxu0 0
          %1807 = vmatpush1.bf16.msra.mxu0 0
          %1808 = vmatprep.subr.bf16.mxu0 0
          %1809 = vmatpush1.bf16.msra.mxu0 0
          %1810 = vmatprep.subr.bf16.mxu0 0
          %1811 = vmatpush1.bf16.msra.mxu0 0
          %1812 = vmatprep.mubr.bf16.mxu0 0
          %1813 = vmatmul.mubr.bf16.gmra.mrb[0].mxu0 %v1775
          %v1814 = vpop.f32.mrb[0].mxu0
          %v1815 = vadd.f32 %v1769, %v1814
          %v1816 = vpop.f32.mrb[0].mxu0
          %v1817 = vpop.f32.mrb[0].mxu0
          %v1818 = vpop.f32.mrb[0].mxu0
          %1819 = vdwg.mxu0
          %v1820 = vld [vmem:[%s1400] sm:$0xff]
          %v1821 = vrcp.pop %v1820
          %v1822 = vld [vmem:[%s1408] sm:$0xff]
          %1824 = vset.pattern.permute.xlu0 0
          %1825 = vperm.xlu0 %1824, %v1821
          %v1826 = vpop.permute.xlu0 %1825
          %v1828 = vmul.f32 %v1822, %v1826
          %v1829 = vpack.c.bf16 %v1828, %v1828
          %v1831 = vsel %vm877, %v1829, 0
          %v1834 = vsel %vm960, %v1706, 0
          %1836 = vmatprep.subr.bf16.mxu0 0
          %1837 = vmatpush1.bf16.msra.mxu0 %v1834
          %1838 = vmatprep.subr.bf16.mxu0 0
          %1839 = vmatpush1.bf16.msra.mxu0 0
          %1840 = vmatprep.subr.bf16.mxu0 0
          %1841 = vmatpush1.bf16.msra.mxu0 0
          %1842 = vmatprep.subr.bf16.mxu0 0
          %1843 = vmatpush1.bf16.msra.mxu0 0
          %1844 = vmatprep.subr.bf16.mxu0 0
          %1845 = vmatpush1.bf16.msra.mxu0 0
          %1846 = vmatprep.subr.bf16.mxu0 0
          %1847 = vmatpush1.bf16.msra.mxu0 0
          %1848 = vmatprep.subr.bf16.mxu0 0
          %1849 = vmatpush1.bf16.msra.mxu0 0
          %1850 = vmatprep.subr.bf16.mxu0 0
          %1851 = vmatpush1.bf16.msra.mxu0 0
          %1852 = vmatprep.subr.bf16.mxu0 0
          %1853 = vmatpush1.bf16.msra.mxu0 0
          %1854 = vmatprep.subr.bf16.mxu0 0
          %1855 = vmatpush1.bf16.msra.mxu0 0
          %1856 = vmatprep.subr.bf16.mxu0 0
          %1857 = vmatpush1.bf16.msra.mxu0 0
          %1858 = vmatprep.subr.bf16.mxu0 0
          %1859 = vmatpush1.bf16.msra.mxu0 0
          %1860 = vmatprep.subr.bf16.mxu0 0
          %1861 = vmatpush1.bf16.msra.mxu0 0
          %1862 = vmatprep.subr.bf16.mxu0 0
          %1863 = vmatpush1.bf16.msra.mxu0 0
          %1864 = vmatprep.subr.bf16.mxu0 0
          %1865 = vmatpush1.bf16.msra.mxu0 0
          %1866 = vmatprep.subr.bf16.mxu0 0
          %1867 = vmatpush1.bf16.msra.mxu0 0
          %1868 = vmatprep.mubr.bf16.mxu0 0
          %1869 = vmatmul.mubr.bf16.gmra.mrb[0].mxu0 %v1831
          %v1870 = vpop.f32.mrb[0].mxu0
          %v1871 = vadd.f32 0.0, %v1870
          %v1872 = vpop.f32.mrb[0].mxu0
          %v1873 = vpop.f32.mrb[0].mxu0
          %v1874 = vpop.f32.mrb[0].mxu0
          %1875 = vdwg.mxu0
          %v1876 = vadd.f32 %v1815, %v1871
          %v1877 = vld [vmem:[%s1630] sm:$0xff]
          %v1878 = vrcp.pop %v1877
          %v1879 = vld [vmem:[%s1638] sm:$0xff]
          %1881 = vset.pattern.permute.xlu0 0
          %1882 = vperm.xlu0 %1881, %v1878
          %v1883 = vpop.permute.xlu0 %1882
          %v1885 = vmul.f32 %v1879, %v1883
          %v1886 = vpack.c.bf16 %v1885, %v1885
          %v1888 = vsel %vm877, %v1886, 0
          %v1891 = vsel %vm960, %v1707, 0
          %1893 = vmatprep.subr.bf16.mxu0 0
          %1894 = vmatpush1.bf16.msra.mxu0 %v1891
          %1895 = vmatprep.subr.bf16.mxu0 0
          %1896 = vmatpush1.bf16.msra.mxu0 0
          %1897 = vmatprep.subr.bf16.mxu0 0
          %1898 = vmatpush1.bf16.msra.mxu0 0
          %1899 = vmatprep.subr.bf16.mxu0 0
          %1900 = vmatpush1.bf16.msra.mxu0 0
          %1901 = vmatprep.subr.bf16.mxu0 0
          %1902 = vmatpush1.bf16.msra.mxu0 0
          %1903 = vmatprep.subr.bf16.mxu0 0
          %1904 = vmatpush1.bf16.msra.mxu0 0
          %1905 = vmatprep.subr.bf16.mxu0 0
          %1906 = vmatpush1.bf16.msra.mxu0 0
          %1907 = vmatprep.subr.bf16.mxu0 0
          %1908 = vmatpush1.bf16.msra.mxu0 0
          %1909 = vmatprep.subr.bf16.mxu0 0
          %1910 = vmatpush1.bf16.msra.mxu0 0
          %1911 = vmatprep.subr.bf16.mxu0 0
          %1912 = vmatpush1.bf16.msra.mxu0 0
          %1913 = vmatprep.subr.bf16.mxu0 0
          %1914 = vmatpush1.bf16.msra.mxu0 0
          %1915 = vmatprep.subr.bf16.mxu0 0
          %1916 = vmatpush1.bf16.msra.mxu0 0
          %1917 = vmatprep.subr.bf16.mxu0 0
          %1918 = vmatpush1.bf16.msra.mxu0 0
          %1919 = vmatprep.subr.bf16.mxu0 0
          %1920 = vmatpush1.bf16.msra.mxu0 0
          %1921 = vmatprep.subr.bf16.mxu0 0
          %1922 = vmatpush1.bf16.msra.mxu0 0
          %1923 = vmatprep.subr.bf16.mxu0 0
          %1924 = vmatpush1.bf16.msra.mxu0 0
          %1925 = vmatprep.mubr.bf16.mxu0 0
          %1926 = vmatmul.mubr.bf16.gmra.mrb[0].mxu0 %v1888
          %v1927 = vpop.f32.mrb[0].mxu0
          %v1928 = vadd.f32 0.0, %v1927
          %v1929 = vpop.f32.mrb[0].mxu0
          %v1930 = vpop.f32.mrb[0].mxu0
          %v1931 = vpop.f32.mrb[0].mxu0
          %1932 = vdwg.mxu0
          %v1933 = vadd.f32 %v1876, %v1928
          %v1934 = vld [vmem:[%s10] sm:$0x1]
          %v1936 = vlaneseq
          %v1937 = vshrl.u32 %v1936, 7
          %v1938 = vsub.s32 0, %v1937
          %v1939 = vrot.slane %v1934, %v1938
          %v1941 = vadd.f32 %v1933, %v1939
          %1942 = vst.msk [vmem:[%s448] sm:$0xff] %vm780, %v1941
        $region72: #{tpu_custom_call.1} parent=63 // pred_fallthru
          _
        %s1943 = sand.u32 %s306, 1
        %s1944 = scalar_lea.sflag [#allocation7], %s1943
        %s1945 = sand.u32 %s306, 1
        %s1946 = smul.addr %s1945, 8
        %s1947 = scalar_lea.vmem [#allocation6], %s1946
        // Predicated region
        $region73: #{tpu_custom_call.1} parent=63 // pred_check
          %p1948 = pneg %p316
        $region74: #{tpu_custom_call.1} parent=63 // pred_check_branch
          %1950 = sbr.rel (%p1948) target = $region76
        $region75: #{tpu_custom_call.1} parent=63 // pred_region
          %s1952 = ssub.s32 128, 128
          %1953 = vsyncadd %s1944, %s1952
          %s1954 = sadd.s32 %s31, %s30
          %s1955 = smul.addr %s1954, 128
          %s1956 = scalar_lea.hbm %s11, %s1955
          %s1958 = sshll.u32 %s1947, 4
          %s1959 = int_to_ptr.vmem [resolvable:$true] %s1958
          %1961 = dma.vmem_to_hbm [thread:$0]  %s1959, 128, %s1956, %s1944
        $region76: #{tpu_custom_call.1} parent=63 // pred_fallthru
          _
      $region64: #{tpu_custom_call.1} parent=5 // pred_fallthru
        _
      %p1962 = scmp.le.s32.totalorder 2, %s20
      // Predicated region
      $region77: #{tpu_custom_call.1} parent=5 // pred_check
        %p1963 = pneg %p1962
      $region78: #{tpu_custom_call.1} parent=5 // pred_check_branch
        %1965 = sbr.rel (%p1963) target = $region80
      $region79: #{tpu_custom_call.1} parent=5 // pred_region
        %s1966 = ssub.s32 %s20, 2
        // Predicated region
        $region81: #{tpu_custom_call.1} parent=79 // pred_check
          %p1967 = pneg %p322
        $region82: #{tpu_custom_call.1} parent=79 // pred_check_branch
          %1969 = sbr.rel (%p1967) target = $region84
        $region83: #{tpu_custom_call.1} parent=79 // pred_region
          %s1970 = sand.u32 %s307, 1
          %s1971 = scalar_lea.sflag [#allocation7], %s1970
          %s1972 = sand.u32 %s307, 1
          %s1973 = smul.addr %s1972, 8
          %s1974 = scalar_lea.vmem [#allocation6], %s1973
          %1975 = dma.done %s1971, 128
        $region84: #{tpu_custom_call.1} parent=79 // pred_fallthru
          _
      $region80: #{tpu_custom_call.1} parent=5 // pred_fallthru
        _
    $region6: #{tpu_custom_call.1} parent=1 // loop_footer
      %s24 = sadd.s32 1, %s20
    $region7: #{tpu_custom_call.1} parent=1 // loop_footer_branch
      %19 = sbr.rel target = $region3
    $region8: #{tpu_custom_call.1} parent=1 // loop_exit
      _
    %1976 = vsyncpa [#allocation7], 1
    %s1977 = scalar_lea.sflag [#allocation7], 1
    %1978 = vsyncpa %s1977, 1

</llo_original>
